<compile_context>
chip_gen: v7x
topology: tpu7x:2x2x1
jax: 0.10.0
libtpu: 0.0.40
codegen_flags: <defaults>
</compile_context>

<pallas_src>
import functools

import jax
import jax.numpy as jnp
from jax.experimental import pallas as pl
from jax.experimental.pallas import tpu as pltpu


# ---------------------------------------------------------------------------
# Fused kernel: conv1 -> conv2 -> global max-pool -> fc3 -> fc4 -> proj (+ I)
# Grid = (B, cdiv(N, TN)); channels on sublanes, points on lanes.
# ---------------------------------------------------------------------------
def stnkd_fused_kernel(x_ref, w1_ref, b1_ref, w2_ref, b2_ref,
                       w3_ref, b3_ref, w4_ref, b4_ref, w5_ref, b5_ref,
                       out_ref, maxacc_ref, *, n_total, tn, mask_tail):
    n = pl.program_id(1)
    nt = pl.num_programs(1)

    x = x_ref[0]                                                     # (K, TN)

    # stn_layer_1: Conv1d(k,16,1) + folded BN + ReLU
    h = jnp.dot(w1_ref[...], x, preferred_element_type=jnp.float32)
    h = jnp.maximum(h + b1_ref[...], 0.0)                            # (16, TN)

    # stn_layer_2: Conv1d(16,64,1) + folded BN + ReLU
    h = jnp.dot(w2_ref[...], h, preferred_element_type=jnp.float32)
    h = jnp.maximum(h + b2_ref[...], 0.0)                            # (64, TN)

    if mask_tail:
        # Zero the out-of-range tail columns.  Post-ReLU activations are >= 0
        # and every channel has >= 1 valid column, so zeros cannot change the
        # per-channel max.  (Garbage columns only affect garbage output
        # columns of the 1x1-conv matmuls, so no cross-contamination.)
        lane = jax.lax.broadcasted_iota(jnp.int32, h.shape, 1)
        valid = (n * tn + lane) < n_total
        h = jnp.where(valid, h, 0.0)

    # Elementwise running max (VALU) into the resident VMEM scratch; the lane
    # (XLU) reduction is done once, at the last tile only.
    @pl.when(n == 0)
    def _():
        maxacc_ref[...] = h

    @pl.when(n != 0)
    def _():
        maxacc_ref[...] = jnp.maximum(maxacc_ref[...], h)

    # Fused FC head at the last point-tile of each batch element.
    @pl.when(n == nt - 1)
    def _():
        g = jnp.max(maxacc_ref[...], axis=1, keepdims=True)          # (64, 1)
        g = g.T                                                      # (1, 64)
        # stn_layer_3: Linear(64,32) + folded BN + ReLU
        g = jnp.maximum(
            jnp.dot(g, w3_ref[...], preferred_element_type=jnp.float32)
            + b3_ref[...], 0.0)                                      # (1, 32)
        # stn_layer_4: Linear(32,16) + folded BN + ReLU
        g = jnp.maximum(
            jnp.dot(g, w4_ref[...], preferred_element_type=jnp.float32)
            + b4_ref[...], 0.0)                                      # (1, 16)
        # stn_proj + identity (identity folded into the bias on the host).
        out_ref[0] = (
            jnp.dot(g, w5_ref[...], preferred_element_type=jnp.float32)
            + b5_ref[...])                                           # (1, kk)


# ---------------------------------------------------------------------------
# Wrapper
# ---------------------------------------------------------------------------
def stnkd_forward(x_bkn, params, *, tn=1024):
    """x_bkn: (B, K, N) float32 in PyTorch Conv1d (NCL) layout. Returns (B, K, K)."""
    (w1f, b1f, w2f, b2f, w3f, b3f, w4f, b4f, w5t, b5e) = params
    B, K, N = x_bkn.shape
    kk = w5t.shape[1]

    # Point tile: multiple of 128 lanes, clamped so one tile never exceeds the
    # (rounded-up) point count.  No `tn = N` fallback -> VMEM-safe for large N.
    tn = max(128, (tn // 128) * 128)
    n_pad = ((N + 127) // 128) * 128
    tn = min(tn, n_pad)
    nt = pl.cdiv(N, tn)
    mask_tail = (N % tn) != 0

    kernel = functools.partial(
        stnkd_fused_kernel, n_total=N, tn=tn, mask_tail=mask_tail)

    def const_spec(a):
        nd = a.ndim
        return pl.BlockSpec(a.shape, lambda b, n, _nd=nd: (0,) * _nd)

    consts = (w1f, b1f, w2f, b2f, w3f, b3f, w4f, b4f, w5t, b5e)

    out = pl.pallas_call(
        kernel,
        out_shape=jax.ShapeDtypeStruct((B, 1, kk), jnp.float32),
        grid=(B, nt),
        in_specs=[pl.BlockSpec((1, K, tn), lambda b, n: (b, 0, n))]
                 + [const_spec(a) for a in consts],
        out_specs=pl.BlockSpec((1, 1, kk), lambda b, n: (b, 0, 0)),
        scratch_shapes=[pltpu.VMEM((64, tn), jnp.float32)],
        compiler_params=pltpu.CompilerParams(
            # B shards across TensorCores on v7x; N (reduction) axis last.
            dimension_semantics=("parallel", "arbitrary")),
    )(x_bkn, *consts)

    return out.reshape(B, K, K)


# ---------------------------------------------------------------------------
# Parameters
# ---------------------------------------------------------------------------
def init_raw_params(key, k):
    """Synthetic parameters with the same shapes as STNkd.__init__.

    Note: the PyTorch module zero-initializes stn_proj; here the projection is
    non-zero so the test actually exercises the FC head and the max-pool
    (kernel semantics are identical either way).
    """
    keys = iter(jax.random.split(key, 32))

    def layer(cin, cout):
        bound = 1.0 / jnp.sqrt(jnp.float32(cin))
        W = jax.random.uniform(next(keys), (cout, cin), jnp.float32, -bound, bound)
        b = jax.random.uniform(next(keys), (cout,), jnp.float32, -bound, bound)
        return W, b

    def bn(c):
        gamma = 1.0 + 0.1 * jax.random.normal(next(keys), (c,), jnp.float32)
        beta = 0.1 * jax.random.normal(next(keys), (c,), jnp.float32)
        mean = 0.1 * jax.random.normal(next(keys), (c,), jnp.float32)
        var = 1.0 + 0.2 * jax.random.uniform(next(keys), (c,), jnp.float32)
        return gamma, beta, mean, var

    raw = {}
    raw["conv1"] = layer(k, 16)
    raw["bn1"] = bn(16)
    raw["conv2"] = layer(16, 64)
    raw["bn2"] = bn(64)
    raw["fc3"] = layer(64, 32)
    raw["bn3"] = bn(32)
    raw["fc4"] = layer(32, 16)
    raw["bn4"] = bn(16)
    raw["proj"] = layer(16, k * k)
    return raw


def fold_params(raw, k, eps=1e-5):
    """Fold eval-mode BatchNorm (and the identity add) into weights/biases."""
    def bn_scale_shift(bn):
        gamma, beta, mean, var = bn
        s = gamma / jnp.sqrt(var + eps)
        return s, beta - mean * s

    W1, b1 = raw["conv1"]; s1, t1 = bn_scale_shift(raw["bn1"])
    W2, b2 = raw["conv2"]; s2, t2 = bn_scale_shift(raw["bn2"])
    W3, b3 = raw["fc3"];   s3, t3 = bn_scale_shift(raw["bn3"])
    W4, b4 = raw["fc4"];   s4, t4 = bn_scale_shift(raw["bn4"])
    W5, b5 = raw["proj"]

    # Conv layers keep (Cout, Cin) orientation (channels on sublanes).
    w1f = W1 * s1[:, None];        b1f = (b1 * s1 + t1)[:, None]      # (16,k),(16,1)
    w2f = W2 * s2[:, None];        b2f = (b2 * s2 + t2)[:, None]      # (64,16),(64,1)
    # FC layers are transposed so the head is (1,Cin) @ (Cin,Cout), lane-dense.
    w3f = W3.T * s3[None, :];      b3f = (b3 * s3 + t3)[None, :]      # (64,32),(1,32)
    w4f = W4.T * s4[None, :];      b4f = (b4 * s4 + t4)[None, :]      # (32,16),(1,16)
    w5t = W5.T                                                        # (16,k*k)
    b5e = (b5 + jnp.eye(k, dtype=jnp.float32).reshape(-1))[None, :]   # (1,k*k)
    return (w1f, b1f, w2f, b2f, w3f, b3f, w4f, b4f, w5t, b5e)


# ---------------------------------------------------------------------------
# Pure-JAX reference (eval-mode BN), computed from the UNFOLDED parameters
# ---------------------------------------------------------------------------
def reference_forward(x, raw, k, eps=1e-5):
    W1, b1 = raw["conv1"]
    W2, b2 = raw["conv2"]
    W3, b3 = raw["fc3"]
    W4, b4 = raw["fc4"]
    W5, b5 = raw["proj"]

    def bn_c(h, p):  # h: (B, C, N)
        g, be, m, v = p
        return (h - m[:, None]) * (g / jnp.sqrt(v + eps))[:, None] + be[:, None]

    def bn_f(h, p):  # h: (B, C)
        g, be, m, v = p
        return (h - m) * (g / jnp.sqrt(v + eps)) + be

    h = jnp.einsum('oc,bcn->bon', W1, x) + b1[:, None]
    h = jnp.maximum(bn_c(h, raw["bn1"]), 0.0)
    h = jnp.einsum('oc,bcn->bon', W2, h) + b2[:, None]
    h = jnp.maximum(bn_c(h, raw["bn2"]), 0.0)
    gfeat = jnp.max(h, axis=2)                                        # (B, 64)
    h = gfeat @ W3.T + b3
    h = jnp.maximum(bn_f(h, raw["bn3"]), 0.0)
    h = h @ W4.T + b4
    h = jnp.maximum(bn_f(h, raw["bn4"]), 0.0)
    out = h @ W5.T + b5
    return out.reshape(-1, k, k) + jnp.eye(k, dtype=jnp.float32)[None]


if __name__ == "__main__":
    k = 4        # STNkd(k=4)
    B = 2        # batch
    N = 1200     # number of points; NOT a multiple of the tile -> exercises
                 # the cdiv grid, tail masking and multi-tile max accumulation
                 # with the default tn=1024 tile.

    key = jax.random.PRNGKey(0)
    kx, kp = jax.random.split(key)
    x = jax.random.normal(kx, (B, k, N), jnp.float32)   # PyTorch NCL layout

    raw = init_raw_params(kp, k)
    params = fold_params(raw, k)

    out = stnkd_forward(x, params)
    out = jax.block_until_ready(out)

    ref = reference_forward(x, raw, k)
    assert out.shape == (B, k, k), out.shape
    assert jnp.all(jnp.isfinite(out))
    assert jnp.allclose(out, ref, atol=1e-4, rtol=1e-4), (
        "max abs diff = %e" % float(jnp.max(jnp.abs(out - ref))))
    print("KERNEL_OK")
</pallas_src>

<mosaic_0001>
module attributes {stable_mosaic.version = 11 : i64} {
  func.func @stnkd_fused_kernel(%arg0: i32, %arg1: i32, %arg2: memref<1x4x1024xf32, #tpu.memory_space<vmem>>, %arg3: memref<16x4xf32, #tpu.memory_space<vmem>>, %arg4: memref<16x1xf32, #tpu.memory_space<vmem>>, %arg5: memref<64x16xf32, #tpu.memory_space<vmem>>, %arg6: memref<64x1xf32, #tpu.memory_space<vmem>>, %arg7: memref<64x32xf32, #tpu.memory_space<vmem>>, %arg8: memref<1x32xf32, #tpu.memory_space<vmem>>, %arg9: memref<32x16xf32, #tpu.memory_space<vmem>>, %arg10: memref<1x16xf32, #tpu.memory_space<vmem>>, %arg11: memref<16x16xf32, #tpu.memory_space<vmem>>, %arg12: memref<1x16xf32, #tpu.memory_space<vmem>>, %arg13: memref<1x1x16xf32, #tpu.memory_space<vmem>>, %arg14: memref<64x1024xf32, #tpu.memory_space<vmem>>) attributes {dimension_semantics = [#tpu.dimension_semantics<parallel>, #tpu.dimension_semantics<arbitrary>], iteration_bounds = array<i64: 2, 2>, scalar_prefetch = 0 : i64, scratch_operands = 1 : i64, tpu.core_type = #tpu.core_type<tc>, window_params = [{transform_indices = @transform_0, window_bounds = array<i64: 1, 4, 1024>}, {pipeline_mode = #tpu.pipeline_mode<synchronous>, transform_indices = @transform_1, window_bounds = array<i64: 16, 4>}, {pipeline_mode = #tpu.pipeline_mode<synchronous>, transform_indices = @transform_2, window_bounds = array<i64: 16, 1>}, {pipeline_mode = #tpu.pipeline_mode<synchronous>, transform_indices = @transform_3, window_bounds = array<i64: 64, 16>}, {pipeline_mode = #tpu.pipeline_mode<synchronous>, transform_indices = @transform_4, window_bounds = array<i64: 64, 1>}, {pipeline_mode = #tpu.pipeline_mode<synchronous>, transform_indices = @transform_5, window_bounds = array<i64: 64, 32>}, {pipeline_mode = #tpu.pipeline_mode<synchronous>, transform_indices = @transform_6, window_bounds = array<i64: 1, 32>}, {pipeline_mode = #tpu.pipeline_mode<synchronous>, transform_indices = @transform_7, window_bounds = array<i64: 32, 16>}, {pipeline_mode = #tpu.pipeline_mode<synchronous>, transform_indices = @transform_8, window_bounds = array<i64: 1, 16>}, {pipeline_mode = #tpu.pipeline_mode<synchronous>, transform_indices = @transform_9, window_bounds = array<i64: 16, 16>}, {pipeline_mode = #tpu.pipeline_mode<synchronous>, transform_indices = @transform_10, window_bounds = array<i64: 1, 16>}, {transform_indices = @transform_11, window_bounds = array<i64: 1, 1, 16>}]} {
    %c0 = arith.constant 0 : index
    %c0_0 = arith.constant 0 : index
    %c0_1 = arith.constant 0 : index
    %0 = vector.load %arg2[%c0, %c0_0, %c0_1] : memref<1x4x1024xf32, #tpu.memory_space<vmem>>, vector<1x4x1024xf32>
    %1 = vector.shape_cast %0 : vector<1x4x1024xf32> to vector<4x1024xf32>
    %c0_2 = arith.constant 0 : index
    %c0_3 = arith.constant 0 : index
    %2 = vector.load %arg3[%c0_2, %c0_3] : memref<16x4xf32, #tpu.memory_space<vmem>>, vector<16x4xf32>
    %cst = arith.constant dense<0.000000e+00> : vector<16x1024xf32>
    %3 = tpu.matmul %2, %1, %cst {dimension_numbers = #tpu.dot_dimension_numbers<[1], [0], [0], [1], [0, 0, 1, 1], [], []>} : vector<16x4xf32>, vector<4x1024xf32>, vector<16x1024xf32> -> vector<16x1024xf32>
    %c0_4 = arith.constant 0 : index
    %c0_5 = arith.constant 0 : index
    %4 = vector.load %arg4[%c0_4, %c0_5] : memref<16x1xf32, #tpu.memory_space<vmem>>, vector<16x1xf32>
    %5 = vector.broadcast %4 : vector<16x1xf32> to vector<16x1024xf32>
    %6 = arith.addf %3, %5 : vector<16x1024xf32>
    %cst_6 = arith.constant 0.000000e+00 : f32
    %7 = vector.broadcast %cst_6 : f32 to vector<16x1024xf32>
    %8 = arith.maximumf %6, %7 : vector<16x1024xf32>
    %c0_7 = arith.constant 0 : index
    %c0_8 = arith.constant 0 : index
    %9 = vector.load %arg5[%c0_7, %c0_8] : memref<64x16xf32, #tpu.memory_space<vmem>>, vector<64x16xf32>
    %cst_9 = arith.constant dense<0.000000e+00> : vector<64x1024xf32>
    %10 = tpu.matmul %9, %8, %cst_9 {dimension_numbers = #tpu.dot_dimension_numbers<[1], [0], [0], [1], [0, 0, 1, 1], [], []>} : vector<64x16xf32>, vector<16x1024xf32>, vector<64x1024xf32> -> vector<64x1024xf32>
    %c0_10 = arith.constant 0 : index
    %c0_11 = arith.constant 0 : index
    %11 = vector.load %arg6[%c0_10, %c0_11] : memref<64x1xf32, #tpu.memory_space<vmem>>, vector<64x1xf32>
    %12 = vector.broadcast %11 : vector<64x1xf32> to vector<64x1024xf32>
    %13 = arith.addf %10, %12 : vector<64x1024xf32>
    %cst_12 = arith.constant 0.000000e+00 : f32
    %14 = vector.broadcast %cst_12 : f32 to vector<64x1024xf32>
    %15 = arith.maximumf %13, %14 : vector<64x1024xf32>
    %16 = tpu.iota {dimensions = array<i32: 1>} : vector<64x1024xi32>
    %c1024_i32 = arith.constant 1024 : i32
    %17 = arith.muli %arg1, %c1024_i32 : i32
    %18 = vector.broadcast %17 : i32 to vector<64x1024xi32>
    %19 = arith.addi %18, %16 : vector<64x1024xi32>
    %c1200_i32 = arith.constant 1200 : i32
    %20 = vector.broadcast %c1200_i32 : i32 to vector<64x1024xi32>
    %21 = arith.cmpi slt, %19, %20 : vector<64x1024xi32>
    %cst_13 = arith.constant 0.000000e+00 : f32
    %22 = vector.broadcast %cst_13 : f32 to vector<64x1024xf32>
    %23 = arith.select %21, %15, %22 : vector<64x1024xi1>, vector<64x1024xf32>
    %c0_i32 = arith.constant 0 : i32
    %24 = arith.cmpi eq, %arg1, %c0_i32 : i32
    %25 = arith.extui %24 : i1 to i32
    %c0_i32_14 = arith.constant 0 : i32
    %26 = arith.cmpi ne, %25, %c0_i32_14 : i32
    scf.if %26 {
      %c0_18 = arith.constant 0 : index
      %c0_19 = arith.constant 0 : index
      %33 = vector.load %arg14[%c0_18, %c0_19] : memref<64x1024xf32, #tpu.memory_space<vmem>>, vector<64x1024xf32>
      tpu.vector_store %arg14[%c0_18, %c0_19], %23 {strides = array<i32>} : memref<64x1024xf32, #tpu.memory_space<vmem>>, vector<64x1024xf32>,
    } else {
    }
    %c0_i32_15 = arith.constant 0 : i32
    %27 = arith.cmpi ne, %arg1, %c0_i32_15 : i32
    %28 = arith.extui %27 : i1 to i32
    %c0_i32_16 = arith.constant 0 : i32
    %29 = arith.cmpi ne, %28, %c0_i32_16 : i32
    scf.if %29 {
      %c0_18 = arith.constant 0 : index
      %c0_19 = arith.constant 0 : index
      %33 = vector.load %arg14[%c0_18, %c0_19] : memref<64x1024xf32, #tpu.memory_space<vmem>>, vector<64x1024xf32>
      %34 = arith.maximumf %33, %23 : vector<64x1024xf32>
      %c0_20 = arith.constant 0 : index
      %c0_21 = arith.constant 0 : index
      %35 = vector.load %arg14[%c0_20, %c0_21] : memref<64x1024xf32, #tpu.memory_space<vmem>>, vector<64x1024xf32>
      tpu.vector_store %arg14[%c0_20, %c0_21], %34 {strides = array<i32>} : memref<64x1024xf32, #tpu.memory_space<vmem>>, vector<64x1024xf32>,
    } else {
    }
    %c1_i32 = arith.constant 1 : i32
    %30 = arith.cmpi eq, %arg1, %c1_i32 : i32
    %31 = arith.extui %30 : i1 to i32
    %c0_i32_17 = arith.constant 0 : i32
    %32 = arith.cmpi ne, %31, %c0_i32_17 : i32
    scf.if %32 {
      %c0_18 = arith.constant 0 : index
      %c0_19 = arith.constant 0 : index
      %33 = vector.load %arg14[%c0_18, %c0_19] : memref<64x1024xf32, #tpu.memory_space<vmem>>, vector<64x1024xf32>
      %cst_20 = arith.constant dense<0xFF800000> : vector<64xf32>
      %34 = vector.multi_reduction <maximumf>, %33, %cst_20 [1] : vector<64x1024xf32> to vector<64xf32>
      %35 = vector.shape_cast %34 : vector<64xf32> to vector<64x1xf32>
      %36 = tpu.transpose %35, [1, 0] : vector<64x1xf32> -> vector<1x64xf32>
      %c0_21 = arith.constant 0 : index
      %c0_22 = arith.constant 0 : index
      %37 = vector.load %arg7[%c0_21, %c0_22] : memref<64x32xf32, #tpu.memory_space<vmem>>, vector<64x32xf32>
      %cst_23 = arith.constant dense<0.000000e+00> : vector<1x32xf32>
      %38 = tpu.matmul %36, %37, %cst_23 {dimension_numbers = #tpu.dot_dimension_numbers<[1], [0], [0], [1], [0, 0, 1, 1], [], []>} : vector<1x64xf32>, vector<64x32xf32>, vector<1x32xf32> -> vector<1x32xf32>
      %c0_24 = arith.constant 0 : index
      %c0_25 = arith.constant 0 : index
      %39 = vector.load %arg8[%c0_24, %c0_25] : memref<1x32xf32, #tpu.memory_space<vmem>>, vector<1x32xf32>
      %40 = arith.addf %38, %39 : vector<1x32xf32>
      %cst_26 = arith.constant 0.000000e+00 : f32
      %41 = vector.broadcast %cst_26 : f32 to vector<1x32xf32>
      %42 = arith.maximumf %40, %41 : vector<1x32xf32>
      %c0_27 = arith.constant 0 : index
      %c0_28 = arith.constant 0 : index
      %43 = vector.load %arg9[%c0_27, %c0_28] : memref<32x16xf32, #tpu.memory_space<vmem>>, vector<32x16xf32>
      %cst_29 = arith.constant dense<0.000000e+00> : vector<1x16xf32>
      %44 = tpu.matmul %42, %43, %cst_29 {dimension_numbers = #tpu.dot_dimension_numbers<[1], [0], [0], [1], [0, 0, 1, 1], [], []>} : vector<1x32xf32>, vector<32x16xf32>, vector<1x16xf32> -> vector<1x16xf32>
      %c0_30 = arith.constant 0 : index
      %c0_31 = arith.constant 0 : index
      %45 = vector.load %arg10[%c0_30, %c0_31] : memref<1x16xf32, #tpu.memory_space<vmem>>, vector<1x16xf32>
      %46 = arith.addf %44, %45 : vector<1x16xf32>
      %cst_32 = arith.constant 0.000000e+00 : f32
      %47 = vector.broadcast %cst_32 : f32 to vector<1x16xf32>
      %48 = arith.maximumf %46, %47 : vector<1x16xf32>
      %c0_33 = arith.constant 0 : index
      %c0_34 = arith.constant 0 : index
      %49 = vector.load %arg11[%c0_33, %c0_34] : memref<16x16xf32, #tpu.memory_space<vmem>>, vector<16x16xf32>
      %cst_35 = arith.constant dense<0.000000e+00> : vector<1x16xf32>
      %50 = tpu.matmul %48, %49, %cst_35 {dimension_numbers = #tpu.dot_dimension_numbers<[1], [0], [0], [1], [0, 0, 1, 1], [], []>} : vector<1x16xf32>, vector<16x16xf32>, vector<1x16xf32> -> vector<1x16xf32>
      %c0_36 = arith.constant 0 : index
      %c0_37 = arith.constant 0 : index
      %51 = vector.load %arg12[%c0_36, %c0_37] : memref<1x16xf32, #tpu.memory_space<vmem>>, vector<1x16xf32>
      %52 = arith.addf %50, %51 : vector<1x16xf32>
      %c0_38 = arith.constant 0 : index
      %c0_39 = arith.constant 0 : index
      %c0_40 = arith.constant 0 : index
      %53 = vector.load %arg13[%c0_38, %c0_39, %c0_40] : memref<1x1x16xf32, #tpu.memory_space<vmem>>, vector<1x1x16xf32>
      %54 = vector.shape_cast %53 : vector<1x1x16xf32> to vector<1x16xf32>
      %55 = vector.shape_cast %52 : vector<1x16xf32> to vector<1x1x16xf32>
      tpu.vector_store %arg13[%c0_38, %c0_39, %c0_40], %55 {strides = array<i32>} : memref<1x1x16xf32, #tpu.memory_space<vmem>>, vector<1x1x16xf32>,
    } else {
    }
    return
  }
  func.func @transform_0(%arg0: i32, %arg1: i32) -> (i32, i32, i32) {
    %c0_i32 = arith.constant 0 : i32
    %c0_i32_0 = arith.constant 0 : i32
    return %arg0, %c0_i32, %arg1 : i32, i32, i32
  }
  func.func @transform_1(%arg0: i32, %arg1: i32) -> (i32, i32) {
    %c0_i32 = arith.constant 0 : i32
    %c0_i32_0 = arith.constant 0 : i32
    %c0_i32_1 = arith.constant 0 : i32
    return %c0_i32, %c0_i32_0 : i32, i32
  }
  func.func @transform_2(%arg0: i32, %arg1: i32) -> (i32, i32) {
    %c0_i32 = arith.constant 0 : i32
    %c0_i32_0 = arith.constant 0 : i32
    %c0_i32_1 = arith.constant 0 : i32
    return %c0_i32, %c0_i32_0 : i32, i32
  }
  func.func @transform_3(%arg0: i32, %arg1: i32) -> (i32, i32) {
    %c0_i32 = arith.constant 0 : i32
    %c0_i32_0 = arith.constant 0 : i32
    %c0_i32_1 = arith.constant 0 : i32
    return %c0_i32, %c0_i32_0 : i32, i32
  }
  func.func @transform_4(%arg0: i32, %arg1: i32) -> (i32, i32) {
    %c0_i32 = arith.constant 0 : i32
    %c0_i32_0 = arith.constant 0 : i32
    %c0_i32_1 = arith.constant 0 : i32
    return %c0_i32, %c0_i32_0 : i32, i32
  }
  func.func @transform_5(%arg0: i32, %arg1: i32) -> (i32, i32) {
    %c0_i32 = arith.constant 0 : i32
    %c0_i32_0 = arith.constant 0 : i32
    %c0_i32_1 = arith.constant 0 : i32
    return %c0_i32, %c0_i32_0 : i32, i32
  }
  func.func @transform_6(%arg0: i32, %arg1: i32) -> (i32, i32) {
    %c0_i32 = arith.constant 0 : i32
    %c0_i32_0 = arith.constant 0 : i32
    %c0_i32_1 = arith.constant 0 : i32
    return %c0_i32, %c0_i32_0 : i32, i32
  }
  func.func @transform_7(%arg0: i32, %arg1: i32) -> (i32, i32) {
    %c0_i32 = arith.constant 0 : i32
    %c0_i32_0 = arith.constant 0 : i32
    %c0_i32_1 = arith.constant 0 : i32
    return %c0_i32, %c0_i32_0 : i32, i32
  }
  func.func @transform_8(%arg0: i32, %arg1: i32) -> (i32, i32) {
    %c0_i32 = arith.constant 0 : i32
    %c0_i32_0 = arith.constant 0 : i32
    %c0_i32_1 = arith.constant 0 : i32
    return %c0_i32, %c0_i32_0 : i32, i32
  }
  func.func @transform_9(%arg0: i32, %arg1: i32) -> (i32, i32) {
    %c0_i32 = arith.constant 0 : i32
    %c0_i32_0 = arith.constant 0 : i32
    %c0_i32_1 = arith.constant 0 : i32
    return %c0_i32, %c0_i32_0 : i32, i32
  }
  func.func @transform_10(%arg0: i32, %arg1: i32) -> (i32, i32) {
    %c0_i32 = arith.constant 0 : i32
    %c0_i32_0 = arith.constant 0 : i32
    %c0_i32_1 = arith.constant 0 : i32
    return %c0_i32, %c0_i32_0 : i32, i32
  }
  func.func @transform_11(%arg0: i32, %arg1: i32) -> (i32, i32, i32) {
    %c0_i32 = arith.constant 0 : i32
    %c0_i32_0 = arith.constant 0 : i32
    %c0_i32_1 = arith.constant 0 : i32
    return %arg0, %c0_i32, %c0_i32_0 : i32, i32, i32
  }
}

</mosaic_0001>

<llo_original>
// kernel: tpu_custom_call.1
$region0: #{tpu_custom_call.1}
  #allocation0 [shape = 'u32[]', space=smem, size = 0x4, offset = 0x4, fixed_abs, tag = 'smem constant byte address 0x4 - core index']
  #allocation1 [shape = 'u32[144,128]{1,0:T(1,128)}', space=vmem, size = 0x12000, scoped, tag = 'internal scratch']
  #allocation2 [shape = 'f32[64,1024]{1,0:T(8,128)}', space=vmem, size = 0x40000, scoped, tag = 'scratch operand']
  %s0 = inlined_call_operand.vmem [shape: f32[2,4,1200], index: 0, kind: input, shape index: {}]
  %s1 = inlined_call_operand.vmem [shape: f32[16,4], index: 1, kind: input, shape index: {}]
  %s2 = inlined_call_operand.vmem [shape: f32[16,1], index: 2, kind: input, shape index: {}]
  %s3 = inlined_call_operand.vmem [shape: f32[64,16], index: 3, kind: input, shape index: {}]
  %s4 = inlined_call_operand.vmem [shape: f32[64,1], index: 4, kind: input, shape index: {}]
  %s5 = inlined_call_operand.vmem [shape: f32[64,32], index: 5, kind: input, shape index: {}]
  %s6 = inlined_call_operand.vmem [shape: f32[1,32], index: 6, kind: input, shape index: {}]
  %s7 = inlined_call_operand.vmem [shape: f32[32,16], index: 7, kind: input, shape index: {}]
  %s8 = inlined_call_operand.vmem [shape: f32[1,16], index: 8, kind: input, shape index: {}]
  %s9 = inlined_call_operand.vmem [shape: f32[16,16], index: 9, kind: input, shape index: {}]
  %s10 = inlined_call_operand.vmem [shape: f32[1,16], index: 10, kind: input, shape index: {}]
  %s11 = inlined_call_operand.hbm [shape: f32[2,1,16], index: 11, kind: output, shape index: {}]
  %s12 = sld [smem:[#allocation0]]
  $region89: #{tpu_custom_call.1} parent=0
    _
  %s14 = ssub.s32 1, %s12
  %s15 = scalar_select 0, %s14, %s12
  $region1: #{tpu_custom_call.1} parent=0
    #allocation3 [shape = 'u8[1024]{0}', space=vmem, size = 0x400, scoped, tag = 'output window, operand 0']
    #allocation4 [shape = 's32[2]{0}', space=sflag, size = 0x8, scoped, tag = 'scoped memory for tpu_custom_call.1']
    %16 = vsyncpa [#allocation4], 0
    %s17 = scalar_lea.sflag [#allocation4], 1
    %18 = vsyncpa %s17, 0
    loop: start=0, step=1, limit=6
    $region2: #{tpu_custom_call.1} parent=1 // loop_pre_header
      _
    $region3: #{tpu_custom_call.1} parent=1 // loop_header
      %s20 = sphi 0, %s24
      %p21 = scmp.ge.s32.totalorder %s20, 6
      %s27 = sphi 0, %s39
      %s28 = sphi 0, %s35
      %s29 = sphi 0, %s27
      %s30 = sphi 0, %s28
      %s31 = sphi 0, %s29
      %s32 = sphi 0, %s30
      %s44 = sphi 0, %s46
      %s47 = sphi 0, %s44
      %s48 = sphi 0, %s47
      %s64 = sphi 0, %s48
      %s68 = sphi 0, %s68
      %s70 = sphi 0, %s68
      %s71 = sphi 0, %s70
      %s85 = sphi 0, %s71
      %s89 = sphi 0, %s89
      %s91 = sphi 0, %s89
      %s92 = sphi 0, %s91
      %s106 = sphi 0, %s92
      %s110 = sphi 0, %s110
      %s112 = sphi 0, %s110
      %s113 = sphi 0, %s112
      %s127 = sphi 0, %s113
      %s131 = sphi 0, %s131
      %s133 = sphi 0, %s131
      %s134 = sphi 0, %s133
      %s148 = sphi 0, %s134
      %s152 = sphi 0, %s152
      %s154 = sphi 0, %s152
      %s155 = sphi 0, %s154
      %s169 = sphi 0, %s155
      %s173 = sphi 0, %s173
      %s175 = sphi 0, %s173
      %s176 = sphi 0, %s175
      %s190 = sphi 0, %s176
      %s194 = sphi 0, %s194
      %s196 = sphi 0, %s194
      %s197 = sphi 0, %s196
      %s211 = sphi 0, %s197
      %s215 = sphi 0, %s215
      %s217 = sphi 0, %s215
      %s218 = sphi 0, %s217
      %s232 = sphi 0, %s218
      %s236 = sphi 0, %s236
      %s238 = sphi 0, %s236
      %s239 = sphi 0, %s238
      %s253 = sphi 0, %s239
      %s257 = sphi 0, %s257
      %s259 = sphi 0, %s257
      %s260 = sphi 0, %s259
      %s274 = sphi 0, %s260
      %s280 = sphi 0, %s282
      %s283 = sphi 0, %s280
      %s284 = sphi 0, %s283
      %s300 = sphi 0, %s284
    $region4: #{tpu_custom_call.1} parent=1 // loop_header_branch
      %23 = sbr.rel (%p21) target = $region8
    $region5: #{tpu_custom_call.1} parent=1 // loop_body
      %s25 = ssub.s32 %s20, 1
      %s26 = ssub.s32 %s20, 2
      %s33 = sadd.s32 1, %s28
      %p34 = scmp.ge.s32.totalorder %s33, 2
      %s35 = scalar_select %p34, 0, %s33
      %s36 = sadd.s32 1, %s27
      %s37 = scalar_select %p34, %s36, %s27
      %p38 = scmp.ge.s32.totalorder %s37, 2
      %s39 = scalar_select %p38, 0, %s37
      %s40 = ssub.s32 %s27, %s39
      %s41 = ssub.s32 %s28, %s35
      %s42 = sor.u32 %s40, %s41
      %p43 = scmp.eq.s32.totalorder %s42, 0
      %s45 = sadd.s32 %s44, 1
      %s46 = scalar_select %p43, %s44, %s45
      %p49 = pneg %p43
      %p50 = scmp.eq.s32.totalorder %s20, 3
      %p51 = por %p49, %p50
      %p52 = scmp.ne.s32.totalorder %s44, %s47
      %p53 = scmp.eq.s32.totalorder %s20, 0
      %p54 = por %p52, %p53
      %p55 = scmp.ne.s32.totalorder %s44, %s47
      %p56 = scmp.eq.s32.totalorder %s25, 3
      %p57 = por %p55, %p56
      %p58 = scmp.ne.s32.totalorder %s47, %s48
      %p59 = scmp.eq.s32.totalorder %s25, 0
      %p60 = por %p58, %p59
      %p61 = scmp.ne.s32.totalorder %s47, %s48
      %p62 = scmp.eq.s32.totalorder %s26, 3
      %p63 = por %p61, %p62
      %p65 = scmp.ne.s32.totalorder %s48, %s64
      %p66 = scmp.eq.s32.totalorder %s26, 0
      %p67 = por %p65, %p66
      %s69 = sadd.s32 %s68, 1
      %p72 = scmp.eq.s32.totalorder %s20, 3
      %p73 = scmp.ne.s32.totalorder %s68, %s70
      %p74 = scmp.eq.s32.totalorder %s20, 0
      %p75 = por %p73, %p74
      %p76 = scmp.ne.s32.totalorder %s68, %s70
      %p77 = scmp.eq.s32.totalorder %s25, 3
      %p78 = por %p76, %p77
      %p79 = scmp.ne.s32.totalorder %s70, %s71
      %p80 = scmp.eq.s32.totalorder %s25, 0
      %p81 = por %p79, %p80
      %p82 = scmp.ne.s32.totalorder %s70, %s71
      %p83 = scmp.eq.s32.totalorder %s26, 3
      %p84 = por %p82, %p83
      %p86 = scmp.ne.s32.totalorder %s71, %s85
      %p87 = scmp.eq.s32.totalorder %s26, 0
      %p88 = por %p86, %p87
      %s90 = sadd.s32 %s89, 1
      %p93 = scmp.eq.s32.totalorder %s20, 3
      %p94 = scmp.ne.s32.totalorder %s89, %s91
      %p95 = scmp.eq.s32.totalorder %s20, 0
      %p96 = por %p94, %p95
      %p97 = scmp.ne.s32.totalorder %s89, %s91
      %p98 = scmp.eq.s32.totalorder %s25, 3
      %p99 = por %p97, %p98
      %p100 = scmp.ne.s32.totalorder %s91, %s92
      %p101 = scmp.eq.s32.totalorder %s25, 0
      %p102 = por %p100, %p101
      %p103 = scmp.ne.s32.totalorder %s91, %s92
      %p104 = scmp.eq.s32.totalorder %s26, 3
      %p105 = por %p103, %p104
      %p107 = scmp.ne.s32.totalorder %s92, %s106
      %p108 = scmp.eq.s32.totalorder %s26, 0
      %p109 = por %p107, %p108
      %s111 = sadd.s32 %s110, 1
      %p114 = scmp.eq.s32.totalorder %s20, 3
      %p115 = scmp.ne.s32.totalorder %s110, %s112
      %p116 = scmp.eq.s32.totalorder %s20, 0
      %p117 = por %p115, %p116
      %p118 = scmp.ne.s32.totalorder %s110, %s112
      %p119 = scmp.eq.s32.totalorder %s25, 3
      %p120 = por %p118, %p119
      %p121 = scmp.ne.s32.totalorder %s112, %s113
      %p122 = scmp.eq.s32.totalorder %s25, 0
      %p123 = por %p121, %p122
      %p124 = scmp.ne.s32.totalorder %s112, %s113
      %p125 = scmp.eq.s32.totalorder %s26, 3
      %p126 = por %p124, %p125
      %p128 = scmp.ne.s32.totalorder %s113, %s127
      %p129 = scmp.eq.s32.totalorder %s26, 0
      %p130 = por %p128, %p129
      %s132 = sadd.s32 %s131, 1
      %p135 = scmp.eq.s32.totalorder %s20, 3
      %p136 = scmp.ne.s32.totalorder %s131, %s133
      %p137 = scmp.eq.s32.totalorder %s20, 0
      %p138 = por %p136, %p137
      %p139 = scmp.ne.s32.totalorder %s131, %s133
      %p140 = scmp.eq.s32.totalorder %s25, 3
      %p141 = por %p139, %p140
      %p142 = scmp.ne.s32.totalorder %s133, %s134
      %p143 = scmp.eq.s32.totalorder %s25, 0
      %p144 = por %p142, %p143
      %p145 = scmp.ne.s32.totalorder %s133, %s134
      %p146 = scmp.eq.s32.totalorder %s26, 3
      %p147 = por %p145, %p146
      %p149 = scmp.ne.s32.totalorder %s134, %s148
      %p150 = scmp.eq.s32.totalorder %s26, 0
      %p151 = por %p149, %p150
      %s153 = sadd.s32 %s152, 1
      %p156 = scmp.eq.s32.totalorder %s20, 3
      %p157 = scmp.ne.s32.totalorder %s152, %s154
      %p158 = scmp.eq.s32.totalorder %s20, 0
      %p159 = por %p157, %p158
      %p160 = scmp.ne.s32.totalorder %s152, %s154
      %p161 = scmp.eq.s32.totalorder %s25, 3
      %p162 = por %p160, %p161
      %p163 = scmp.ne.s32.totalorder %s154, %s155
      %p164 = scmp.eq.s32.totalorder %s25, 0
      %p165 = por %p163, %p164
      %p166 = scmp.ne.s32.totalorder %s154, %s155
      %p167 = scmp.eq.s32.totalorder %s26, 3
      %p168 = por %p166, %p167
      %p170 = scmp.ne.s32.totalorder %s155, %s169
      %p171 = scmp.eq.s32.totalorder %s26, 0
      %p172 = por %p170, %p171
      %s174 = sadd.s32 %s173, 1
      %p177 = scmp.eq.s32.totalorder %s20, 3
      %p178 = scmp.ne.s32.totalorder %s173, %s175
      %p179 = scmp.eq.s32.totalorder %s20, 0
      %p180 = por %p178, %p179
      %p181 = scmp.ne.s32.totalorder %s173, %s175
      %p182 = scmp.eq.s32.totalorder %s25, 3
      %p183 = por %p181, %p182
      %p184 = scmp.ne.s32.totalorder %s175, %s176
      %p185 = scmp.eq.s32.totalorder %s25, 0
      %p186 = por %p184, %p185
      %p187 = scmp.ne.s32.totalorder %s175, %s176
      %p188 = scmp.eq.s32.totalorder %s26, 3
      %p189 = por %p187, %p188
      %p191 = scmp.ne.s32.totalorder %s176, %s190
      %p192 = scmp.eq.s32.totalorder %s26, 0
      %p193 = por %p191, %p192
      %s195 = sadd.s32 %s194, 1
      %p198 = scmp.eq.s32.totalorder %s20, 3
      %p199 = scmp.ne.s32.totalorder %s194, %s196
      %p200 = scmp.eq.s32.totalorder %s20, 0
      %p201 = por %p199, %p200
      %p202 = scmp.ne.s32.totalorder %s194, %s196
      %p203 = scmp.eq.s32.totalorder %s25, 3
      %p204 = por %p202, %p203
      %p205 = scmp.ne.s32.totalorder %s196, %s197
      %p206 = scmp.eq.s32.totalorder %s25, 0
      %p207 = por %p205, %p206
      %p208 = scmp.ne.s32.totalorder %s196, %s197
      %p209 = scmp.eq.s32.totalorder %s26, 3
      %p210 = por %p208, %p209
      %p212 = scmp.ne.s32.totalorder %s197, %s211
      %p213 = scmp.eq.s32.totalorder %s26, 0
      %p214 = por %p212, %p213
      %s216 = sadd.s32 %s215, 1
      %p219 = scmp.eq.s32.totalorder %s20, 3
      %p220 = scmp.ne.s32.totalorder %s215, %s217
      %p221 = scmp.eq.s32.totalorder %s20, 0
      %p222 = por %p220, %p221
      %p223 = scmp.ne.s32.totalorder %s215, %s217
      %p224 = scmp.eq.s32.totalorder %s25, 3
      %p225 = por %p223, %p224
      %p226 = scmp.ne.s32.totalorder %s217, %s218
      %p227 = scmp.eq.s32.totalorder %s25, 0
      %p228 = por %p226, %p227
      %p229 = scmp.ne.s32.totalorder %s217, %s218
      %p230 = scmp.eq.s32.totalorder %s26, 3
      %p231 = por %p229, %p230
      %p233 = scmp.ne.s32.totalorder %s218, %s232
      %p234 = scmp.eq.s32.totalorder %s26, 0
      %p235 = por %p233, %p234
      %s237 = sadd.s32 %s236, 1
      %p240 = scmp.eq.s32.totalorder %s20, 3
      %p241 = scmp.ne.s32.totalorder %s236, %s238
      %p242 = scmp.eq.s32.totalorder %s20, 0
      %p243 = por %p241, %p242
      %p244 = scmp.ne.s32.totalorder %s236, %s238
      %p245 = scmp.eq.s32.totalorder %s25, 3
      %p246 = por %p244, %p245
      %p247 = scmp.ne.s32.totalorder %s238, %s239
      %p248 = scmp.eq.s32.totalorder %s25, 0
      %p249 = por %p247, %p248
      %p250 = scmp.ne.s32.totalorder %s238, %s239
      %p251 = scmp.eq.s32.totalorder %s26, 3
      %p252 = por %p250, %p251
      %p254 = scmp.ne.s32.totalorder %s239, %s253
      %p255 = scmp.eq.s32.totalorder %s26, 0
      %p256 = por %p254, %p255
      %s258 = sadd.s32 %s257, 1
      %p261 = scmp.eq.s32.totalorder %s20, 3
      %p262 = scmp.ne.s32.totalorder %s257, %s259
      %p263 = scmp.eq.s32.totalorder %s20, 0
      %p264 = por %p262, %p263
      %p265 = scmp.ne.s32.totalorder %s257, %s259
      %p266 = scmp.eq.s32.totalorder %s25, 3
      %p267 = por %p265, %p266
      %p268 = scmp.ne.s32.totalorder %s259, %s260
      %p269 = scmp.eq.s32.totalorder %s25, 0
      %p270 = por %p268, %p269
      %p271 = scmp.ne.s32.totalorder %s259, %s260
      %p272 = scmp.eq.s32.totalorder %s26, 3
      %p273 = por %p271, %p272
      %p275 = scmp.ne.s32.totalorder %s260, %s274
      %p276 = scmp.eq.s32.totalorder %s26, 0
      %p277 = por %p275, %p276
      %s278 = ssub.s32 %s27, %s39
      %p279 = scmp.eq.s32.totalorder %s278, 0
      %s281 = sadd.s32 %s280, 1
      %s282 = scalar_select %p279, %s280, %s281
      %p285 = pneg %p279
      %p286 = scmp.eq.s32.totalorder %s20, 3
      %p287 = por %p285, %p286
      %p288 = scmp.ne.s32.totalorder %s280, %s283
      %p289 = scmp.eq.s32.totalorder %s20, 0
      %p290 = por %p288, %p289
      %p291 = scmp.ne.s32.totalorder %s280, %s283
      %p292 = scmp.eq.s32.totalorder %s25, 3
      %p293 = por %p291, %p292
      %p294 = scmp.ne.s32.totalorder %s283, %s284
      %p295 = scmp.eq.s32.totalorder %s25, 0
      %p296 = por %p294, %p295
      %p297 = scmp.ne.s32.totalorder %s283, %s284
      %p298 = scmp.eq.s32.totalorder %s26, 3
      %p299 = por %p297, %p298
      %p301 = scmp.ne.s32.totalorder %s284, %s300
      %p302 = scmp.eq.s32.totalorder %s26, 0
      %p303 = por %p301, %p302
      %p304 = scmp.le.s32.totalorder 1, %s20
      %p305 = scmp.lt.s32.totalorder %s20, 5
      %p306 = pnand %p304, %p305
      %p307 = pneg %p306
      // Predicated region
      $region9: #{tpu_custom_call.1} parent=5 // pred_check
        _
      $region10: #{tpu_custom_call.1} parent=5 // pred_check_branch
        %309 = sbr.rel (%p306) target = $region12
      $region11: #{tpu_custom_call.1} parent=5 // pred_region
        %s310 = ssub.s32 %s20, 1
        // Predicated region
        $region13: #{tpu_custom_call.1} parent=11 // pred_check
          %p311 = pneg %p81
        $region14: #{tpu_custom_call.1} parent=11 // pred_check_branch
          %313 = sbr.rel (%p311) target = $region16
        $region15: #{tpu_custom_call.1} parent=11 // pred_region
          _
        $region16: #{tpu_custom_call.1} parent=11 // pred_fallthru
          _
        // Predicated region
        $region17: #{tpu_custom_call.1} parent=11 // pred_check
          %p314 = pneg %p102
        $region18: #{tpu_custom_call.1} parent=11 // pred_check_branch
          %316 = sbr.rel (%p314) target = $region20
        $region19: #{tpu_custom_call.1} parent=11 // pred_region
          _
        $region20: #{tpu_custom_call.1} parent=11 // pred_fallthru
          _
        // Predicated region
        $region21: #{tpu_custom_call.1} parent=11 // pred_check
          %p317 = pneg %p123
        $region22: #{tpu_custom_call.1} parent=11 // pred_check_branch
          %319 = sbr.rel (%p317) target = $region24
        $region23: #{tpu_custom_call.1} parent=11 // pred_region
          _
        $region24: #{tpu_custom_call.1} parent=11 // pred_fallthru
          _
        // Predicated region
        $region25: #{tpu_custom_call.1} parent=11 // pred_check
          %p320 = pneg %p144
        $region26: #{tpu_custom_call.1} parent=11 // pred_check_branch
          %322 = sbr.rel (%p320) target = $region28
        $region27: #{tpu_custom_call.1} parent=11 // pred_region
          _
        $region28: #{tpu_custom_call.1} parent=11 // pred_fallthru
          _
        // Predicated region
        $region29: #{tpu_custom_call.1} parent=11 // pred_check
          %p323 = pneg %p165
        $region30: #{tpu_custom_call.1} parent=11 // pred_check_branch
          %325 = sbr.rel (%p323) target = $region32
        $region31: #{tpu_custom_call.1} parent=11 // pred_region
          _
        $region32: #{tpu_custom_call.1} parent=11 // pred_fallthru
          _
        // Predicated region
        $region33: #{tpu_custom_call.1} parent=11 // pred_check
          %p326 = pneg %p186
        $region34: #{tpu_custom_call.1} parent=11 // pred_check_branch
          %328 = sbr.rel (%p326) target = $region36
        $region35: #{tpu_custom_call.1} parent=11 // pred_region
          _
        $region36: #{tpu_custom_call.1} parent=11 // pred_fallthru
          _
        // Predicated region
        $region37: #{tpu_custom_call.1} parent=11 // pred_check
          %p329 = pneg %p207
        $region38: #{tpu_custom_call.1} parent=11 // pred_check_branch
          %331 = sbr.rel (%p329) target = $region40
        $region39: #{tpu_custom_call.1} parent=11 // pred_region
          _
        $region40: #{tpu_custom_call.1} parent=11 // pred_fallthru
          _
        // Predicated region
        $region41: #{tpu_custom_call.1} parent=11 // pred_check
          %p332 = pneg %p228
        $region42: #{tpu_custom_call.1} parent=11 // pred_check_branch
          %334 = sbr.rel (%p332) target = $region44
        $region43: #{tpu_custom_call.1} parent=11 // pred_region
          _
        $region44: #{tpu_custom_call.1} parent=11 // pred_fallthru
          _
        // Predicated region
        $region45: #{tpu_custom_call.1} parent=11 // pred_check
          %p335 = pneg %p249
        $region46: #{tpu_custom_call.1} parent=11 // pred_check_branch
          %337 = sbr.rel (%p335) target = $region48
        $region47: #{tpu_custom_call.1} parent=11 // pred_region
          _
        $region48: #{tpu_custom_call.1} parent=11 // pred_fallthru
          _
        // Predicated region
        $region49: #{tpu_custom_call.1} parent=11 // pred_check
          %p338 = pneg %p270
        $region50: #{tpu_custom_call.1} parent=11 // pred_check_branch
          %340 = sbr.rel (%p338) target = $region52
        $region51: #{tpu_custom_call.1} parent=11 // pred_region
          _
        $region52: #{tpu_custom_call.1} parent=11 // pred_fallthru
          _
      $region12: #{tpu_custom_call.1} parent=5 // pred_fallthru
        _
      %p341 = scmp.lt.s32.totalorder %s20, 4
      // Predicated region
      $region53: #{tpu_custom_call.1} parent=5 // pred_check
        %p342 = pneg %p341
      $region54: #{tpu_custom_call.1} parent=5 // pred_check_branch
        %344 = sbr.rel (%p342) target = $region56
      $region55: #{tpu_custom_call.1} parent=5 // pred_region
        // Predicated region
        $region57: #{tpu_custom_call.1} parent=55 // pred_check
          %p345 = pneg %p54
        $region58: #{tpu_custom_call.1} parent=55 // pred_check_branch
          %347 = sbr.rel (%p345) target = $region60
        $region59: #{tpu_custom_call.1} parent=55 // pred_region
          %s348 = smul.u32 8, %s28
          %s349 = ssub.s32 10, %s348
          %p350 = scmp.lt.s32.totalorder %s349, 8
          %s351 = scalar_select %p350, %s349, 8
          %s352 = smul.u32 64, %s351
          %p353 = scmp.lt.s32.totalorder %s27, 1
          %s354 = scalar_select %p353, %s27, 1
          %p355 = scmp.lt.s32.totalorder %s348, 9
          %s356 = scalar_select %p355, %s348, 9
          %s357 = smul.addr %s354, 10
          %s358 = sadd.s32 %s356, %s357
          %s359 = smul.addr %s358, 4
          %s360 = scalar_lea.vmem %s0, %s359
          %s361 = smul.u32 8, %s28
          %s362 = ssub.s32 10, %s361
          %p363 = scmp.lt.s32.totalorder %s362, 8
          %s364 = scalar_select %p363, %s362, 8
          %s365 = smul.u32 64, %s364
        $region60: #{tpu_custom_call.1} parent=55 // pred_fallthru
          _
      $region56: #{tpu_custom_call.1} parent=5 // pred_fallthru
        _
      %p366 = scmp.le.s32.totalorder 1, %s20
      %p367 = scmp.lt.s32.totalorder %s20, 5
      %p368 = pnand %p366, %p367
      %p369 = pneg %p368
      // Predicated region
      $region61: #{tpu_custom_call.1} parent=5 // pred_check
        _
      $region62: #{tpu_custom_call.1} parent=5 // pred_check_branch
        %371 = sbr.rel (%p368) target = $region64
      $region63: #{tpu_custom_call.1} parent=5 // pred_region
        %s372 = ssub.s32 %s20, 1
        %s373 = smul.u32 8, %s30
        %s374 = ssub.s32 10, %s373
        %p375 = scmp.lt.s32.totalorder %s374, 8
        %s376 = scalar_select %p375, %s374, 8
        %s377 = smul.u32 64, %s376
        %p378 = scmp.lt.s32.totalorder %s29, 1
        %s379 = scalar_select %p378, %s29, 1
        %p380 = scmp.lt.s32.totalorder %s373, 9
        %s381 = scalar_select %p380, %s373, 9
        %s382 = smul.addr %s379, 10
        %s383 = sadd.s32 %s381, %s382
        %s384 = smul.addr %s383, 4
        %s385 = scalar_lea.vmem %s0, %s384
        %p386 = pneg %p60
        %p387 = pneg %p57
        %p388 = pneg %p81
        %p389 = pneg %p78
        %p390 = pneg %p102
        %p391 = pneg %p99
        %p392 = pneg %p123
        %p393 = pneg %p120
        %p394 = pneg %p144
        %p395 = pneg %p141
        %p396 = pneg %p165
        %p397 = pneg %p162
        %p398 = pneg %p186
        %p399 = pneg %p183
        %p400 = pneg %p207
        %p401 = pneg %p204
        %p402 = pneg %p228
        %p403 = pneg %p225
        %p404 = pneg %p249
        %p405 = pneg %p246
        %p406 = pneg %p270
        %p407 = pneg %p267
        %p408 = pneg %p296
        %p409 = pneg %p293
        %s410 = sand.u32 %s283, 1
        %s411 = scalar_lea.sflag [#allocation4], %s410
        %s412 = sand.u32 %s283, 1
        %s413 = scalar_lea.vmem [#allocation3], %s412
        %s414 = smul.u32 8, %s30
        %s415 = ssub.s32 10, %s414
        %p416 = scmp.lt.s32.totalorder %s415, 8
        %s417 = scalar_select %p416, %s415, 8
        %s418 = smul.u32 64, %s417
        %p419 = scmp.lt.s32.totalorder %s29, 1
        %s420 = scalar_select %p419, %s29, 1
        %p421 = scmp.lt.s32.totalorder %s414, 9
        %s422 = scalar_select %p421, %s414, 9
        %s423 = smul.addr %s420, 10
        %s424 = sadd.s32 %s422, %s423
        %s425 = smul.addr %s424, 4
        %s426 = scalar_lea.vmem %s0, %s425
        %s427 = smul.u32 8, %s30
        %s428 = ssub.s32 10, %s427
        %p429 = scmp.lt.s32.totalorder %s428, 8
        %s430 = scalar_select %p429, %s428, 8
        %s431 = smul.u32 64, %s430
        %v432 = vld [vmem:[%s426] sm:$0xff]
        %v433 = vld [vmem:[%s426 + $0x8] sm:$0xff]
        %v434 = vld [vmem:[%s426 + $0x10] sm:$0xff]
        %v435 = vld [vmem:[%s426 + $0x18] sm:$0xff]
        %v436 = vld [vmem:[%s1] sm:$0xff]
        %v437 = vld [vmem:[%s1 + $0x8] sm:$0xff]
        %v438 = vld [vmem:[%s2] sm:$0xff]
        %v439 = vld [vmem:[%s2 + $0x8] sm:$0xff]
        %441 = vset.pattern.permute.xlu0 0
        %442 = vperm.xlu0 %441, %v438
        %v443 = vpop.permute.xlu0 %442
        %446 = vset.pattern.permute.xlu0 0
        %447 = vperm.xlu0 %446, %v439
        %v448 = vpop.permute.xlu0 %447
        %v454 = vcombine.high %v432, %v432
        %v455 = vcombine.high %v433, %v433
        %v456 = vcombine.high %v434, %v434
        %v457 = vcombine.high %v435, %v435
        %vm458 = vcmask 31744
        %v460 = vsel %vm458, %v436, 0
        %v463 = vsel %vm458, %v437, 0
        %vm465 = vcmask 1043456
        %v466 = vsel %vm465, %v432, 0
        %v468 = vsel %vm465, %v454, 0
        %v470 = vsel %vm465, %v433, 0
        %v472 = vsel %vm465, %v455, 0
        %v474 = vsel %vm465, %v434, 0
        %v476 = vsel %vm465, %v456, 0
        %v478 = vsel %vm465, %v435, 0
        %v480 = vsel %vm465, %v457, 0
        %482 = vmatprep.subr.mxu0 %v468
        %483 = vmatpush1.msra.mxu0 %v466
        %484 = vmatprep.subr.mxu0 0.0
        %485 = vmatpush1.msra.mxu0 0.0
        %486 = vmatprep.subr.mxu0 0.0
        %487 = vmatpush1.msra.mxu0 0.0
        %488 = vmatprep.subr.mxu0 0.0
        %489 = vmatpush1.msra.mxu0 0.0
        %490 = vmatprep.subr.mxu0 0.0
        %491 = vmatpush1.msra.mxu0 0.0
        %492 = vmatprep.subr.mxu0 0.0
        %493 = vmatpush1.msra.mxu0 0.0
        %494 = vmatprep.subr.mxu0 0.0
        %495 = vmatpush1.msra.mxu0 0.0
        %496 = vmatprep.subr.mxu0 0.0
        %497 = vmatpush1.msra.mxu0 0.0
        %498 = vmatprep.subr.mxu0 0.0
        %499 = vmatpush1.msra.mxu0 0.0
        %500 = vmatprep.subr.mxu0 0.0
        %501 = vmatpush1.msra.mxu0 0.0
        %502 = vmatprep.subr.mxu0 0.0
        %503 = vmatpush1.msra.mxu0 0.0
        %504 = vmatprep.subr.mxu0 0.0
        %505 = vmatpush1.msra.mxu0 0.0
        %506 = vmatprep.subr.mxu0 0.0
        %507 = vmatpush1.msra.mxu0 0.0
        %508 = vmatprep.subr.mxu0 0.0
        %509 = vmatpush1.msra.mxu0 0.0
        %510 = vmatprep.subr.mxu0 0.0
        %511 = vmatpush1.msra.mxu0 0.0
        %512 = vmatprep.subr.mxu0 0.0
        %513 = vmatpush1.msra.mxu0 0.0
        %514 = vmatprep.subr.mxu0 0.0
        %515 = vmatpush1.msra.mxu0 0.0
        %516 = vmatprep.subr.mxu0 0.0
        %517 = vmatpush1.msra.mxu0 0.0
        %518 = vmatprep.subr.mxu0 0.0
        %519 = vmatpush1.msra.mxu0 0.0
        %520 = vmatprep.subr.mxu0 0.0
        %521 = vmatpush1.msra.mxu0 0.0
        %522 = vmatprep.subr.mxu0 0.0
        %523 = vmatpush1.msra.mxu0 0.0
        %524 = vmatprep.subr.mxu0 0.0
        %525 = vmatpush1.msra.mxu0 0.0
        %526 = vmatprep.subr.mxu0 0.0
        %527 = vmatpush1.msra.mxu0 0.0
        %528 = vmatprep.subr.mxu0 0.0
        %529 = vmatpush1.msra.mxu0 0.0
        %530 = vmatprep.subr.mxu0 0.0
        %531 = vmatpush1.msra.mxu0 0.0
        %532 = vmatprep.subr.mxu0 0.0
        %533 = vmatpush1.msra.mxu0 0.0
        %534 = vmatprep.subr.mxu0 0.0
        %535 = vmatpush1.msra.mxu0 0.0
        %536 = vmatprep.subr.mxu0 0.0
        %537 = vmatpush1.msra.mxu0 0.0
        %538 = vmatprep.subr.mxu0 0.0
        %539 = vmatpush1.msra.mxu0 0.0
        %540 = vmatprep.subr.mxu0 0.0
        %541 = vmatpush1.msra.mxu0 0.0
        %542 = vmatprep.subr.mxu0 0.0
        %543 = vmatpush1.msra.mxu0 0.0
        %544 = vmatprep.subr.mxu0 0.0
        %545 = vmatpush1.msra.mxu0 0.0
        %546 = vmatprep.mubr.f32.mxu0 0.0
        %547 = vmatmul.mubr.f32.gmra.mrb[0].mxu0 %v460
        %v548 = vpop.f32.mrb[0].mxu0
        %v549 = vadd.f32 %v443, %v548
        %v550 = vpop.f32.mrb[0].mxu0
        %v551 = vadd.f32 %v443, %v550
        %552 = vmatprep.mubr.f32.mxu0 0.0
        %553 = vmatmul.mubr.f32.gmra.mrb[0].mxu0 %v463
        %v554 = vpop.f32.mrb[0].mxu0
        %v555 = vadd.f32 %v448, %v554
        %v556 = vpop.f32.mrb[0].mxu0
        %v557 = vadd.f32 %v448, %v556
        %558 = vdwg.mxu0
        %559 = vmatprep.subr.mxu0 %v472
        %560 = vmatpush1.msra.mxu0 %v470
        %561 = vmatprep.subr.mxu0 0.0
        %562 = vmatpush1.msra.mxu0 0.0
        %563 = vmatprep.subr.mxu0 0.0
        %564 = vmatpush1.msra.mxu0 0.0
        %565 = vmatprep.subr.mxu0 0.0
        %566 = vmatpush1.msra.mxu0 0.0
        %567 = vmatprep.subr.mxu0 0.0
        %568 = vmatpush1.msra.mxu0 0.0
        %569 = vmatprep.subr.mxu0 0.0
        %570 = vmatpush1.msra.mxu0 0.0
        %571 = vmatprep.subr.mxu0 0.0
        %572 = vmatpush1.msra.mxu0 0.0
        %573 = vmatprep.subr.mxu0 0.0
        %574 = vmatpush1.msra.mxu0 0.0
        %575 = vmatprep.subr.mxu0 0.0
        %576 = vmatpush1.msra.mxu0 0.0
        %577 = vmatprep.subr.mxu0 0.0
        %578 = vmatpush1.msra.mxu0 0.0
        %579 = vmatprep.subr.mxu0 0.0
        %580 = vmatpush1.msra.mxu0 0.0
        %581 = vmatprep.subr.mxu0 0.0
        %582 = vmatpush1.msra.mxu0 0.0
        %583 = vmatprep.subr.mxu0 0.0
        %584 = vmatpush1.msra.mxu0 0.0
        %585 = vmatprep.subr.mxu0 0.0
        %586 = vmatpush1.msra.mxu0 0.0
        %587 = vmatprep.subr.mxu0 0.0
        %588 = vmatpush1.msra.mxu0 0.0
        %589 = vmatprep.subr.mxu0 0.0
        %590 = vmatpush1.msra.mxu0 0.0
        %591 = vmatprep.subr.mxu0 0.0
        %592 = vmatpush1.msra.mxu0 0.0
        %593 = vmatprep.subr.mxu0 0.0
        %594 = vmatpush1.msra.mxu0 0.0
        %595 = vmatprep.subr.mxu0 0.0
        %596 = vmatpush1.msra.mxu0 0.0
        %597 = vmatprep.subr.mxu0 0.0
        %598 = vmatpush1.msra.mxu0 0.0
        %599 = vmatprep.subr.mxu0 0.0
        %600 = vmatpush1.msra.mxu0 0.0
        %601 = vmatprep.subr.mxu0 0.0
        %602 = vmatpush1.msra.mxu0 0.0
        %603 = vmatprep.subr.mxu0 0.0
        %604 = vmatpush1.msra.mxu0 0.0
        %605 = vmatprep.subr.mxu0 0.0
        %606 = vmatpush1.msra.mxu0 0.0
        %607 = vmatprep.subr.mxu0 0.0
        %608 = vmatpush1.msra.mxu0 0.0
        %609 = vmatprep.subr.mxu0 0.0
        %610 = vmatpush1.msra.mxu0 0.0
        %611 = vmatprep.subr.mxu0 0.0
        %612 = vmatpush1.msra.mxu0 0.0
        %613 = vmatprep.subr.mxu0 0.0
        %614 = vmatpush1.msra.mxu0 0.0
        %615 = vmatprep.subr.mxu0 0.0
        %616 = vmatpush1.msra.mxu0 0.0
        %617 = vmatprep.subr.mxu0 0.0
        %618 = vmatpush1.msra.mxu0 0.0
        %619 = vmatprep.subr.mxu0 0.0
        %620 = vmatpush1.msra.mxu0 0.0
        %621 = vmatprep.subr.mxu0 0.0
        %622 = vmatpush1.msra.mxu0 0.0
        %623 = vmatprep.mubr.f32.mxu0 0.0
        %624 = vmatmul.mubr.f32.gmra.mrb[0].mxu0 %v460
        %v625 = vpop.f32.mrb[0].mxu0
        %v626 = vadd.f32 %v443, %v625
        %v627 = vpop.f32.mrb[0].mxu0
        %v628 = vadd.f32 %v443, %v627
        %629 = vmatprep.mubr.f32.mxu0 0.0
        %630 = vmatmul.mubr.f32.gmra.mrb[0].mxu0 %v463
        %v631 = vpop.f32.mrb[0].mxu0
        %v632 = vadd.f32 %v448, %v631
        %v633 = vpop.f32.mrb[0].mxu0
        %v634 = vadd.f32 %v448, %v633
        %635 = vdwg.mxu0
        %636 = vmatprep.subr.mxu0 %v476
        %637 = vmatpush1.msra.mxu0 %v474
        %638 = vmatprep.subr.mxu0 0.0
        %639 = vmatpush1.msra.mxu0 0.0
        %640 = vmatprep.subr.mxu0 0.0
        %641 = vmatpush1.msra.mxu0 0.0
        %642 = vmatprep.subr.mxu0 0.0
        %643 = vmatpush1.msra.mxu0 0.0
        %644 = vmatprep.subr.mxu0 0.0
        %645 = vmatpush1.msra.mxu0 0.0
        %646 = vmatprep.subr.mxu0 0.0
        %647 = vmatpush1.msra.mxu0 0.0
        %648 = vmatprep.subr.mxu0 0.0
        %649 = vmatpush1.msra.mxu0 0.0
        %650 = vmatprep.subr.mxu0 0.0
        %651 = vmatpush1.msra.mxu0 0.0
        %652 = vmatprep.subr.mxu0 0.0
        %653 = vmatpush1.msra.mxu0 0.0
        %654 = vmatprep.subr.mxu0 0.0
        %655 = vmatpush1.msra.mxu0 0.0
        %656 = vmatprep.subr.mxu0 0.0
        %657 = vmatpush1.msra.mxu0 0.0
        %658 = vmatprep.subr.mxu0 0.0
        %659 = vmatpush1.msra.mxu0 0.0
        %660 = vmatprep.subr.mxu0 0.0
        %661 = vmatpush1.msra.mxu0 0.0
        %662 = vmatprep.subr.mxu0 0.0
        %663 = vmatpush1.msra.mxu0 0.0
        %664 = vmatprep.subr.mxu0 0.0
        %665 = vmatpush1.msra.mxu0 0.0
        %666 = vmatprep.subr.mxu0 0.0
        %667 = vmatpush1.msra.mxu0 0.0
        %668 = vmatprep.subr.mxu0 0.0
        %669 = vmatpush1.msra.mxu0 0.0
        %670 = vmatprep.subr.mxu0 0.0
        %671 = vmatpush1.msra.mxu0 0.0
        %672 = vmatprep.subr.mxu0 0.0
        %673 = vmatpush1.msra.mxu0 0.0
        %674 = vmatprep.subr.mxu0 0.0
        %675 = vmatpush1.msra.mxu0 0.0
        %676 = vmatprep.subr.mxu0 0.0
        %677 = vmatpush1.msra.mxu0 0.0
        %678 = vmatprep.subr.mxu0 0.0
        %679 = vmatpush1.msra.mxu0 0.0
        %680 = vmatprep.subr.mxu0 0.0
        %681 = vmatpush1.msra.mxu0 0.0
        %682 = vmatprep.subr.mxu0 0.0
        %683 = vmatpush1.msra.mxu0 0.0
        %684 = vmatprep.subr.mxu0 0.0
        %685 = vmatpush1.msra.mxu0 0.0
        %686 = vmatprep.subr.mxu0 0.0
        %687 = vmatpush1.msra.mxu0 0.0
        %688 = vmatprep.subr.mxu0 0.0
        %689 = vmatpush1.msra.mxu0 0.0
        %690 = vmatprep.subr.mxu0 0.0
        %691 = vmatpush1.msra.mxu0 0.0
        %692 = vmatprep.subr.mxu0 0.0
        %693 = vmatpush1.msra.mxu0 0.0
        %694 = vmatprep.subr.mxu0 0.0
        %695 = vmatpush1.msra.mxu0 0.0
        %696 = vmatprep.subr.mxu0 0.0
        %697 = vmatpush1.msra.mxu0 0.0
        %698 = vmatprep.subr.mxu0 0.0
        %699 = vmatpush1.msra.mxu0 0.0
        %700 = vmatprep.mubr.f32.mxu0 0.0
        %701 = vmatmul.mubr.f32.gmra.mrb[0].mxu0 %v460
        %v702 = vpop.f32.mrb[0].mxu0
        %v703 = vadd.f32 %v443, %v702
        %v704 = vpop.f32.mrb[0].mxu0
        %v705 = vadd.f32 %v443, %v704
        %706 = vmatprep.mubr.f32.mxu0 0.0
        %707 = vmatmul.mubr.f32.gmra.mrb[0].mxu0 %v463
        %v708 = vpop.f32.mrb[0].mxu0
        %v709 = vadd.f32 %v448, %v708
        %v710 = vpop.f32.mrb[0].mxu0
        %v711 = vadd.f32 %v448, %v710
        %712 = vdwg.mxu0
        %713 = vmatprep.subr.mxu0 %v480
        %714 = vmatpush1.msra.mxu0 %v478
        %715 = vmatprep.subr.mxu0 0.0
        %716 = vmatpush1.msra.mxu0 0.0
        %717 = vmatprep.subr.mxu0 0.0
        %718 = vmatpush1.msra.mxu0 0.0
        %719 = vmatprep.subr.mxu0 0.0
        %720 = vmatpush1.msra.mxu0 0.0
        %721 = vmatprep.subr.mxu0 0.0
        %722 = vmatpush1.msra.mxu0 0.0
        %723 = vmatprep.subr.mxu0 0.0
        %724 = vmatpush1.msra.mxu0 0.0
        %725 = vmatprep.subr.mxu0 0.0
        %726 = vmatpush1.msra.mxu0 0.0
        %727 = vmatprep.subr.mxu0 0.0
        %728 = vmatpush1.msra.mxu0 0.0
        %729 = vmatprep.subr.mxu0 0.0
        %730 = vmatpush1.msra.mxu0 0.0
        %731 = vmatprep.subr.mxu0 0.0
        %732 = vmatpush1.msra.mxu0 0.0
        %733 = vmatprep.subr.mxu0 0.0
        %734 = vmatpush1.msra.mxu0 0.0
        %735 = vmatprep.subr.mxu0 0.0
        %736 = vmatpush1.msra.mxu0 0.0
        %737 = vmatprep.subr.mxu0 0.0
        %738 = vmatpush1.msra.mxu0 0.0
        %739 = vmatprep.subr.mxu0 0.0
        %740 = vmatpush1.msra.mxu0 0.0
        %741 = vmatprep.subr.mxu0 0.0
        %742 = vmatpush1.msra.mxu0 0.0
        %743 = vmatprep.subr.mxu0 0.0
        %744 = vmatpush1.msra.mxu0 0.0
        %745 = vmatprep.subr.mxu0 0.0
        %746 = vmatpush1.msra.mxu0 0.0
        %747 = vmatprep.subr.mxu0 0.0
        %748 = vmatpush1.msra.mxu0 0.0
        %749 = vmatprep.subr.mxu0 0.0
        %750 = vmatpush1.msra.mxu0 0.0
        %751 = vmatprep.subr.mxu0 0.0
        %752 = vmatpush1.msra.mxu0 0.0
        %753 = vmatprep.subr.mxu0 0.0
        %754 = vmatpush1.msra.mxu0 0.0
        %755 = vmatprep.subr.mxu0 0.0
        %756 = vmatpush1.msra.mxu0 0.0
        %757 = vmatprep.subr.mxu0 0.0
        %758 = vmatpush1.msra.mxu0 0.0
        %759 = vmatprep.subr.mxu0 0.0
        %760 = vmatpush1.msra.mxu0 0.0
        %761 = vmatprep.subr.mxu0 0.0
        %762 = vmatpush1.msra.mxu0 0.0
        %763 = vmatprep.subr.mxu0 0.0
        %764 = vmatpush1.msra.mxu0 0.0
        %765 = vmatprep.subr.mxu0 0.0
        %766 = vmatpush1.msra.mxu0 0.0
        %767 = vmatprep.subr.mxu0 0.0
        %768 = vmatpush1.msra.mxu0 0.0
        %769 = vmatprep.subr.mxu0 0.0
        %770 = vmatpush1.msra.mxu0 0.0
        %771 = vmatprep.subr.mxu0 0.0
        %772 = vmatpush1.msra.mxu0 0.0
        %773 = vmatprep.subr.mxu0 0.0
        %774 = vmatpush1.msra.mxu0 0.0
        %775 = vmatprep.subr.mxu0 0.0
        %776 = vmatpush1.msra.mxu0 0.0
        %777 = vmatprep.mubr.f32.mxu0 0.0
        %778 = vmatmul.mubr.f32.gmra.mrb[0].mxu0 %v460
        %v779 = vpop.f32.mrb[0].mxu0
        %v780 = vadd.f32 %v443, %v779
        %v781 = vpop.f32.mrb[0].mxu0
        %v782 = vadd.f32 %v443, %v781
        %783 = vmatprep.mubr.f32.mxu0 0.0
        %784 = vmatmul.mubr.f32.gmra.mrb[0].mxu0 %v463
        %v785 = vpop.f32.mrb[0].mxu0
        %v786 = vadd.f32 %v448, %v785
        %v787 = vpop.f32.mrb[0].mxu0
        %v788 = vadd.f32 %v448, %v787
        %789 = vdwg.mxu0
        %v790 = vmax.f32 %v549, 0.0
        %v791 = vmax.f32 %v551, 0.0
        %v792 = vmax.f32 %v626, 0.0
        %v793 = vmax.f32 %v628, 0.0
        %v794 = vmax.f32 %v703, 0.0
        %v795 = vmax.f32 %v705, 0.0
        %v796 = vmax.f32 %v780, 0.0
        %v797 = vmax.f32 %v782, 0.0
        %v798 = vmax.f32 %v555, 0.0
        %v799 = vmax.f32 %v557, 0.0
        %v800 = vmax.f32 %v632, 0.0
        %v801 = vmax.f32 %v634, 0.0
        %v802 = vmax.f32 %v709, 0.0
        %v803 = vmax.f32 %v711, 0.0
        %v804 = vmax.f32 %v786, 0.0
        %v805 = vmax.f32 %v788, 0.0
        %v806 = vld [vmem:[%s3] sm:$0xff]
        %v807 = vld [vmem:[%s3 + $0x8] sm:$0xff]
        %v808 = vld [vmem:[%s3 + $0x10] sm:$0xff]
        %v809 = vld [vmem:[%s3 + $0x18] sm:$0xff]
        %v810 = vld [vmem:[%s3 + $0x20] sm:$0xff]
        %v811 = vld [vmem:[%s3 + $0x28] sm:$0xff]
        %v812 = vld [vmem:[%s3 + $0x30] sm:$0xff]
        %v813 = vld [vmem:[%s3 + $0x38] sm:$0xff]
        %v814 = vld [vmem:[%s4] sm:$0xff]
        %v815 = vld [vmem:[%s4 + $0x8] sm:$0xff]
        %v816 = vld [vmem:[%s4 + $0x10] sm:$0xff]
        %v817 = vld [vmem:[%s4 + $0x18] sm:$0xff]
        %v818 = vld [vmem:[%s4 + $0x20] sm:$0xff]
        %v819 = vld [vmem:[%s4 + $0x28] sm:$0xff]
        %v820 = vld [vmem:[%s4 + $0x30] sm:$0xff]
        %v821 = vld [vmem:[%s4 + $0x38] sm:$0xff]
        %823 = vset.pattern.permute.xlu0 0
        %824 = vperm.xlu0 %823, %v814
        %v825 = vpop.permute.xlu0 %824
        %828 = vset.pattern.permute.xlu0 0
        %829 = vperm.xlu0 %828, %v815
        %v830 = vpop.permute.xlu0 %829
        %833 = vset.pattern.permute.xlu0 0
        %834 = vperm.xlu0 %833, %v816
        %v835 = vpop.permute.xlu0 %834
        %838 = vset.pattern.permute.xlu0 0
        %839 = vperm.xlu0 %838, %v817
        %v840 = vpop.permute.xlu0 %839
        %843 = vset.pattern.permute.xlu0 0
        %844 = vperm.xlu0 %843, %v818
        %v845 = vpop.permute.xlu0 %844
        %848 = vset.pattern.permute.xlu0 0
        %849 = vperm.xlu0 %848, %v819
        %v850 = vpop.permute.xlu0 %849
        %853 = vset.pattern.permute.xlu0 0
        %854 = vperm.xlu0 %853, %v820
        %v855 = vpop.permute.xlu0 %854
        %858 = vset.pattern.permute.xlu0 0
        %859 = vperm.xlu0 %858, %v821
        %v860 = vpop.permute.xlu0 %859
        %vm862 = vcmask 130048
        %v864 = vsel %vm862, %v806, 0
        %v867 = vsel %vm862, %v807, 0
        %v870 = vsel %vm862, %v808, 0
        %v873 = vsel %vm862, %v809, 0
        %v876 = vsel %vm862, %v810, 0
        %v879 = vsel %vm862, %v811, 0
        %v882 = vsel %vm862, %v812, 0
        %v885 = vsel %vm862, %v813, 0
        %887 = vmatprep.subr.mxu0 %v791
        %888 = vmatpush1.msra.mxu0 %v790
        %889 = vmatprep.subr.mxu0 %v799
        %890 = vmatpush1.msra.mxu0 %v798
        %891 = vmatprep.subr.mxu0 0.0
        %892 = vmatpush1.msra.mxu0 0.0
        %893 = vmatprep.subr.mxu0 0.0
        %894 = vmatpush1.msra.mxu0 0.0
        %895 = vmatprep.subr.mxu0 0.0
        %896 = vmatpush1.msra.mxu0 0.0
        %897 = vmatprep.subr.mxu0 0.0
        %898 = vmatpush1.msra.mxu0 0.0
        %899 = vmatprep.subr.mxu0 0.0
        %900 = vmatpush1.msra.mxu0 0.0
        %901 = vmatprep.subr.mxu0 0.0
        %902 = vmatpush1.msra.mxu0 0.0
        %903 = vmatprep.subr.mxu0 0.0
        %904 = vmatpush1.msra.mxu0 0.0
        %905 = vmatprep.subr.mxu0 0.0
        %906 = vmatpush1.msra.mxu0 0.0
        %907 = vmatprep.subr.mxu0 0.0
        %908 = vmatpush1.msra.mxu0 0.0
        %909 = vmatprep.subr.mxu0 0.0
        %910 = vmatpush1.msra.mxu0 0.0
        %911 = vmatprep.subr.mxu0 0.0
        %912 = vmatpush1.msra.mxu0 0.0
        %913 = vmatprep.subr.mxu0 0.0
        %914 = vmatpush1.msra.mxu0 0.0
        %915 = vmatprep.subr.mxu0 0.0
        %916 = vmatpush1.msra.mxu0 0.0
        %917 = vmatprep.subr.mxu0 0.0
        %918 = vmatpush1.msra.mxu0 0.0
        %919 = vmatprep.subr.mxu0 0.0
        %920 = vmatpush1.msra.mxu0 0.0
        %921 = vmatprep.subr.mxu0 0.0
        %922 = vmatpush1.msra.mxu0 0.0
        %923 = vmatprep.subr.mxu0 0.0
        %924 = vmatpush1.msra.mxu0 0.0
        %925 = vmatprep.subr.mxu0 0.0
        %926 = vmatpush1.msra.mxu0 0.0
        %927 = vmatprep.subr.mxu0 0.0
        %928 = vmatpush1.msra.mxu0 0.0
        %929 = vmatprep.subr.mxu0 0.0
        %930 = vmatpush1.msra.mxu0 0.0
        %931 = vmatprep.subr.mxu0 0.0
        %932 = vmatpush1.msra.mxu0 0.0
        %933 = vmatprep.subr.mxu0 0.0
        %934 = vmatpush1.msra.mxu0 0.0
        %935 = vmatprep.subr.mxu0 0.0
        %936 = vmatpush1.msra.mxu0 0.0
        %937 = vmatprep.subr.mxu0 0.0
        %938 = vmatpush1.msra.mxu0 0.0
        %939 = vmatprep.subr.mxu0 0.0
        %940 = vmatpush1.msra.mxu0 0.0
        %941 = vmatprep.subr.mxu0 0.0
        %942 = vmatpush1.msra.mxu0 0.0
        %943 = vmatprep.subr.mxu0 0.0
        %944 = vmatpush1.msra.mxu0 0.0
        %945 = vmatprep.subr.mxu0 0.0
        %946 = vmatpush1.msra.mxu0 0.0
        %947 = vmatprep.subr.mxu0 0.0
        %948 = vmatpush1.msra.mxu0 0.0
        %949 = vmatprep.subr.mxu0 0.0
        %950 = vmatpush1.msra.mxu0 0.0
        %951 = vmatprep.mubr.f32.mxu0 0.0
        %952 = vmatmul.mubr.f32.gmra.mrb[0].mxu0 %v864
        %v953 = vpop.f32.mrb[0].mxu0
        %v954 = vadd.f32 %v825, %v953
        %v955 = vpop.f32.mrb[0].mxu0
        %v956 = vadd.f32 %v825, %v955
        %957 = vmatprep.mubr.f32.mxu0 0.0
        %958 = vmatmul.mubr.f32.gmra.mrb[0].mxu0 %v867
        %v959 = vpop.f32.mrb[0].mxu0
        %v960 = vadd.f32 %v830, %v959
        %v961 = vpop.f32.mrb[0].mxu0
        %v962 = vadd.f32 %v830, %v961
        %963 = vmatprep.mubr.f32.mxu0 0.0
        %964 = vmatmul.mubr.f32.gmra.mrb[0].mxu0 %v870
        %v965 = vpop.f32.mrb[0].mxu0
        %v966 = vadd.f32 %v835, %v965
        %v967 = vpop.f32.mrb[0].mxu0
        %v968 = vadd.f32 %v835, %v967
        %969 = vmatprep.mubr.f32.mxu0 0.0
        %970 = vmatmul.mubr.f32.gmra.mrb[0].mxu0 %v873
        %v971 = vpop.f32.mrb[0].mxu0
        %v972 = vadd.f32 %v840, %v971
        %v973 = vpop.f32.mrb[0].mxu0
        %v974 = vadd.f32 %v840, %v973
        %975 = vmatprep.mubr.f32.mxu0 0.0
        %976 = vmatmul.mubr.f32.gmra.mrb[0].mxu0 %v876
        %v977 = vpop.f32.mrb[0].mxu0
        %v978 = vadd.f32 %v845, %v977
        %v979 = vpop.f32.mrb[0].mxu0
        %v980 = vadd.f32 %v845, %v979
        %981 = vmatprep.mubr.f32.mxu0 0.0
        %982 = vmatmul.mubr.f32.gmra.mrb[0].mxu0 %v879
        %v983 = vpop.f32.mrb[0].mxu0
        %v984 = vadd.f32 %v850, %v983
        %v985 = vpop.f32.mrb[0].mxu0
        %v986 = vadd.f32 %v850, %v985
        %987 = vmatprep.mubr.f32.mxu0 0.0
        %988 = vmatmul.mubr.f32.gmra.mrb[0].mxu0 %v882
        %v989 = vpop.f32.mrb[0].mxu0
        %v990 = vadd.f32 %v855, %v989
        %v991 = vpop.f32.mrb[0].mxu0
        %v992 = vadd.f32 %v855, %v991
        %993 = vmatprep.mubr.f32.mxu0 0.0
        %994 = vmatmul.mubr.f32.gmra.mrb[0].mxu0 %v885
        %v995 = vpop.f32.mrb[0].mxu0
        %v996 = vadd.f32 %v860, %v995
        %v997 = vpop.f32.mrb[0].mxu0
        %v998 = vadd.f32 %v860, %v997
        %999 = vdwg.mxu0
        %1000 = vmatprep.subr.mxu0 %v793
        %1001 = vmatpush1.msra.mxu0 %v792
        %1002 = vmatprep.subr.mxu0 %v801
        %1003 = vmatpush1.msra.mxu0 %v800
        %1004 = vmatprep.subr.mxu0 0.0
        %1005 = vmatpush1.msra.mxu0 0.0
        %1006 = vmatprep.subr.mxu0 0.0
        %1007 = vmatpush1.msra.mxu0 0.0
        %1008 = vmatprep.subr.mxu0 0.0
        %1009 = vmatpush1.msra.mxu0 0.0
        %1010 = vmatprep.subr.mxu0 0.0
        %1011 = vmatpush1.msra.mxu0 0.0
        %1012 = vmatprep.subr.mxu0 0.0
        %1013 = vmatpush1.msra.mxu0 0.0
        %1014 = vmatprep.subr.mxu0 0.0
        %1015 = vmatpush1.msra.mxu0 0.0
        %1016 = vmatprep.subr.mxu0 0.0
        %1017 = vmatpush1.msra.mxu0 0.0
        %1018 = vmatprep.subr.mxu0 0.0
        %1019 = vmatpush1.msra.mxu0 0.0
        %1020 = vmatprep.subr.mxu0 0.0
        %1021 = vmatpush1.msra.mxu0 0.0
        %1022 = vmatprep.subr.mxu0 0.0
        %1023 = vmatpush1.msra.mxu0 0.0
        %1024 = vmatprep.subr.mxu0 0.0
        %1025 = vmatpush1.msra.mxu0 0.0
        %1026 = vmatprep.subr.mxu0 0.0
        %1027 = vmatpush1.msra.mxu0 0.0
        %1028 = vmatprep.subr.mxu0 0.0
        %1029 = vmatpush1.msra.mxu0 0.0
        %1030 = vmatprep.subr.mxu0 0.0
        %1031 = vmatpush1.msra.mxu0 0.0
        %1032 = vmatprep.subr.mxu0 0.0
        %1033 = vmatpush1.msra.mxu0 0.0
        %1034 = vmatprep.subr.mxu0 0.0
        %1035 = vmatpush1.msra.mxu0 0.0
        %1036 = vmatprep.subr.mxu0 0.0
        %1037 = vmatpush1.msra.mxu0 0.0
        %1038 = vmatprep.subr.mxu0 0.0
        %1039 = vmatpush1.msra.mxu0 0.0
        %1040 = vmatprep.subr.mxu0 0.0
        %1041 = vmatpush1.msra.mxu0 0.0
        %1042 = vmatprep.subr.mxu0 0.0
        %1043 = vmatpush1.msra.mxu0 0.0
        %1044 = vmatprep.subr.mxu0 0.0
        %1045 = vmatpush1.msra.mxu0 0.0
        %1046 = vmatprep.subr.mxu0 0.0
        %1047 = vmatpush1.msra.mxu0 0.0
        %1048 = vmatprep.subr.mxu0 0.0
        %1049 = vmatpush1.msra.mxu0 0.0
        %1050 = vmatprep.subr.mxu0 0.0
        %1051 = vmatpush1.msra.mxu0 0.0
        %1052 = vmatprep.subr.mxu0 0.0
        %1053 = vmatpush1.msra.mxu0 0.0
        %1054 = vmatprep.subr.mxu0 0.0
        %1055 = vmatpush1.msra.mxu0 0.0
        %1056 = vmatprep.subr.mxu0 0.0
        %1057 = vmatpush1.msra.mxu0 0.0
        %1058 = vmatprep.subr.mxu0 0.0
        %1059 = vmatpush1.msra.mxu0 0.0
        %1060 = vmatprep.subr.mxu0 0.0
        %1061 = vmatpush1.msra.mxu0 0.0
        %1062 = vmatprep.subr.mxu0 0.0
        %1063 = vmatpush1.msra.mxu0 0.0
        %1064 = vmatprep.mubr.f32.mxu0 0.0
        %1065 = vmatmul.mubr.f32.gmra.mrb[0].mxu0 %v864
        %v1066 = vpop.f32.mrb[0].mxu0
        %v1067 = vadd.f32 %v825, %v1066
        %v1068 = vpop.f32.mrb[0].mxu0
        %v1069 = vadd.f32 %v825, %v1068
        %1070 = vmatprep.mubr.f32.mxu0 0.0
        %1071 = vmatmul.mubr.f32.gmra.mrb[0].mxu0 %v867
        %v1072 = vpop.f32.mrb[0].mxu0
        %v1073 = vadd.f32 %v830, %v1072
        %v1074 = vpop.f32.mrb[0].mxu0
        %v1075 = vadd.f32 %v830, %v1074
        %1076 = vmatprep.mubr.f32.mxu0 0.0
        %1077 = vmatmul.mubr.f32.gmra.mrb[0].mxu0 %v870
        %v1078 = vpop.f32.mrb[0].mxu0
        %v1079 = vadd.f32 %v835, %v1078
        %v1080 = vpop.f32.mrb[0].mxu0
        %v1081 = vadd.f32 %v835, %v1080
        %1082 = vmatprep.mubr.f32.mxu0 0.0
        %1083 = vmatmul.mubr.f32.gmra.mrb[0].mxu0 %v873
        %v1084 = vpop.f32.mrb[0].mxu0
        %v1085 = vadd.f32 %v840, %v1084
        %v1086 = vpop.f32.mrb[0].mxu0
        %v1087 = vadd.f32 %v840, %v1086
        %1088 = vmatprep.mubr.f32.mxu0 0.0
        %1089 = vmatmul.mubr.f32.gmra.mrb[0].mxu0 %v876
        %v1090 = vpop.f32.mrb[0].mxu0
        %v1091 = vadd.f32 %v845, %v1090
        %v1092 = vpop.f32.mrb[0].mxu0
        %v1093 = vadd.f32 %v845, %v1092
        %1094 = vmatprep.mubr.f32.mxu0 0.0
        %1095 = vmatmul.mubr.f32.gmra.mrb[0].mxu0 %v879
        %v1096 = vpop.f32.mrb[0].mxu0
        %v1097 = vadd.f32 %v850, %v1096
        %v1098 = vpop.f32.mrb[0].mxu0
        %v1099 = vadd.f32 %v850, %v1098
        %1100 = vmatprep.mubr.f32.mxu0 0.0
        %1101 = vmatmul.mubr.f32.gmra.mrb[0].mxu0 %v882
        %v1102 = vpop.f32.mrb[0].mxu0
        %v1103 = vadd.f32 %v855, %v1102
        %v1104 = vpop.f32.mrb[0].mxu0
        %v1105 = vadd.f32 %v855, %v1104
        %1106 = vmatprep.mubr.f32.mxu0 0.0
        %1107 = vmatmul.mubr.f32.gmra.mrb[0].mxu0 %v885
        %v1108 = vpop.f32.mrb[0].mxu0
        %v1109 = vadd.f32 %v860, %v1108
        %v1110 = vpop.f32.mrb[0].mxu0
        %v1111 = vadd.f32 %v860, %v1110
        %1112 = vdwg.mxu0
        %1113 = vmatprep.subr.mxu0 %v795
        %1114 = vmatpush1.msra.mxu0 %v794
        %1115 = vmatprep.subr.mxu0 %v803
        %1116 = vmatpush1.msra.mxu0 %v802
        %1117 = vmatprep.subr.mxu0 0.0
        %1118 = vmatpush1.msra.mxu0 0.0
        %1119 = vmatprep.subr.mxu0 0.0
        %1120 = vmatpush1.msra.mxu0 0.0
        %1121 = vmatprep.subr.mxu0 0.0
        %1122 = vmatpush1.msra.mxu0 0.0
        %1123 = vmatprep.subr.mxu0 0.0
        %1124 = vmatpush1.msra.mxu0 0.0
        %1125 = vmatprep.subr.mxu0 0.0
        %1126 = vmatpush1.msra.mxu0 0.0
        %1127 = vmatprep.subr.mxu0 0.0
        %1128 = vmatpush1.msra.mxu0 0.0
        %1129 = vmatprep.subr.mxu0 0.0
        %1130 = vmatpush1.msra.mxu0 0.0
        %1131 = vmatprep.subr.mxu0 0.0
        %1132 = vmatpush1.msra.mxu0 0.0
        %1133 = vmatprep.subr.mxu0 0.0
        %1134 = vmatpush1.msra.mxu0 0.0
        %1135 = vmatprep.subr.mxu0 0.0
        %1136 = vmatpush1.msra.mxu0 0.0
        %1137 = vmatprep.subr.mxu0 0.0
        %1138 = vmatpush1.msra.mxu0 0.0
        %1139 = vmatprep.subr.mxu0 0.0
        %1140 = vmatpush1.msra.mxu0 0.0
        %1141 = vmatprep.subr.mxu0 0.0
        %1142 = vmatpush1.msra.mxu0 0.0
        %1143 = vmatprep.subr.mxu0 0.0
        %1144 = vmatpush1.msra.mxu0 0.0
        %1145 = vmatprep.subr.mxu0 0.0
        %1146 = vmatpush1.msra.mxu0 0.0
        %1147 = vmatprep.subr.mxu0 0.0
        %1148 = vmatpush1.msra.mxu0 0.0
        %1149 = vmatprep.subr.mxu0 0.0
        %1150 = vmatpush1.msra.mxu0 0.0
        %1151 = vmatprep.subr.mxu0 0.0
        %1152 = vmatpush1.msra.mxu0 0.0
        %1153 = vmatprep.subr.mxu0 0.0
        %1154 = vmatpush1.msra.mxu0 0.0
        %1155 = vmatprep.subr.mxu0 0.0
        %1156 = vmatpush1.msra.mxu0 0.0
        %1157 = vmatprep.subr.mxu0 0.0
        %1158 = vmatpush1.msra.mxu0 0.0
        %1159 = vmatprep.subr.mxu0 0.0
        %1160 = vmatpush1.msra.mxu0 0.0
        %1161 = vmatprep.subr.mxu0 0.0
        %1162 = vmatpush1.msra.mxu0 0.0
        %1163 = vmatprep.subr.mxu0 0.0
        %1164 = vmatpush1.msra.mxu0 0.0
        %1165 = vmatprep.subr.mxu0 0.0
        %1166 = vmatpush1.msra.mxu0 0.0
        %1167 = vmatprep.subr.mxu0 0.0
        %1168 = vmatpush1.msra.mxu0 0.0
        %1169 = vmatprep.subr.mxu0 0.0
        %1170 = vmatpush1.msra.mxu0 0.0
        %1171 = vmatprep.subr.mxu0 0.0
        %1172 = vmatpush1.msra.mxu0 0.0
        %1173 = vmatprep.subr.mxu0 0.0
        %1174 = vmatpush1.msra.mxu0 0.0
        %1175 = vmatprep.subr.mxu0 0.0
        %1176 = vmatpush1.msra.mxu0 0.0
        %1177 = vmatprep.mubr.f32.mxu0 0.0
        %1178 = vmatmul.mubr.f32.gmra.mrb[0].mxu0 %v864
        %v1179 = vpop.f32.mrb[0].mxu0
        %v1180 = vadd.f32 %v825, %v1179
        %v1181 = vpop.f32.mrb[0].mxu0
        %v1182 = vadd.f32 %v825, %v1181
        %1183 = vmatprep.mubr.f32.mxu0 0.0
        %1184 = vmatmul.mubr.f32.gmra.mrb[0].mxu0 %v867
        %v1185 = vpop.f32.mrb[0].mxu0
        %v1186 = vadd.f32 %v830, %v1185
        %v1187 = vpop.f32.mrb[0].mxu0
        %v1188 = vadd.f32 %v830, %v1187
        %1189 = vmatprep.mubr.f32.mxu0 0.0
        %1190 = vmatmul.mubr.f32.gmra.mrb[0].mxu0 %v870
        %v1191 = vpop.f32.mrb[0].mxu0
        %v1192 = vadd.f32 %v835, %v1191
        %v1193 = vpop.f32.mrb[0].mxu0
        %v1194 = vadd.f32 %v835, %v1193
        %1195 = vmatprep.mubr.f32.mxu0 0.0
        %1196 = vmatmul.mubr.f32.gmra.mrb[0].mxu0 %v873
        %v1197 = vpop.f32.mrb[0].mxu0
        %v1198 = vadd.f32 %v840, %v1197
        %v1199 = vpop.f32.mrb[0].mxu0
        %v1200 = vadd.f32 %v840, %v1199
        %1201 = vmatprep.mubr.f32.mxu0 0.0
        %1202 = vmatmul.mubr.f32.gmra.mrb[0].mxu0 %v876
        %v1203 = vpop.f32.mrb[0].mxu0
        %v1204 = vadd.f32 %v845, %v1203
        %v1205 = vpop.f32.mrb[0].mxu0
        %v1206 = vadd.f32 %v845, %v1205
        %1207 = vmatprep.mubr.f32.mxu0 0.0
        %1208 = vmatmul.mubr.f32.gmra.mrb[0].mxu0 %v879
        %v1209 = vpop.f32.mrb[0].mxu0
        %v1210 = vadd.f32 %v850, %v1209
        %v1211 = vpop.f32.mrb[0].mxu0
        %v1212 = vadd.f32 %v850, %v1211
        %1213 = vmatprep.mubr.f32.mxu0 0.0
        %1214 = vmatmul.mubr.f32.gmra.mrb[0].mxu0 %v882
        %v1215 = vpop.f32.mrb[0].mxu0
        %v1216 = vadd.f32 %v855, %v1215
        %v1217 = vpop.f32.mrb[0].mxu0
        %v1218 = vadd.f32 %v855, %v1217
        %1219 = vmatprep.mubr.f32.mxu0 0.0
        %1220 = vmatmul.mubr.f32.gmra.mrb[0].mxu0 %v885
        %v1221 = vpop.f32.mrb[0].mxu0
        %v1222 = vadd.f32 %v860, %v1221
        %v1223 = vpop.f32.mrb[0].mxu0
        %v1224 = vadd.f32 %v860, %v1223
        %1225 = vdwg.mxu0
        %1226 = vmatprep.subr.mxu0 %v797
        %1227 = vmatpush1.msra.mxu0 %v796
        %1228 = vmatprep.subr.mxu0 %v805
        %1229 = vmatpush1.msra.mxu0 %v804
        %1230 = vmatprep.subr.mxu0 0.0
        %1231 = vmatpush1.msra.mxu0 0.0
        %1232 = vmatprep.subr.mxu0 0.0
        %1233 = vmatpush1.msra.mxu0 0.0
        %1234 = vmatprep.subr.mxu0 0.0
        %1235 = vmatpush1.msra.mxu0 0.0
        %1236 = vmatprep.subr.mxu0 0.0
        %1237 = vmatpush1.msra.mxu0 0.0
        %1238 = vmatprep.subr.mxu0 0.0
        %1239 = vmatpush1.msra.mxu0 0.0
        %1240 = vmatprep.subr.mxu0 0.0
        %1241 = vmatpush1.msra.mxu0 0.0
        %1242 = vmatprep.subr.mxu0 0.0
        %1243 = vmatpush1.msra.mxu0 0.0
        %1244 = vmatprep.subr.mxu0 0.0
        %1245 = vmatpush1.msra.mxu0 0.0
        %1246 = vmatprep.subr.mxu0 0.0
        %1247 = vmatpush1.msra.mxu0 0.0
        %1248 = vmatprep.subr.mxu0 0.0
        %1249 = vmatpush1.msra.mxu0 0.0
        %1250 = vmatprep.subr.mxu0 0.0
        %1251 = vmatpush1.msra.mxu0 0.0
        %1252 = vmatprep.subr.mxu0 0.0
        %1253 = vmatpush1.msra.mxu0 0.0
        %1254 = vmatprep.subr.mxu0 0.0
        %1255 = vmatpush1.msra.mxu0 0.0
        %1256 = vmatprep.subr.mxu0 0.0
        %1257 = vmatpush1.msra.mxu0 0.0
        %1258 = vmatprep.subr.mxu0 0.0
        %1259 = vmatpush1.msra.mxu0 0.0
        %1260 = vmatprep.subr.mxu0 0.0
        %1261 = vmatpush1.msra.mxu0 0.0
        %1262 = vmatprep.subr.mxu0 0.0
        %1263 = vmatpush1.msra.mxu0 0.0
        %1264 = vmatprep.subr.mxu0 0.0
        %1265 = vmatpush1.msra.mxu0 0.0
        %1266 = vmatprep.subr.mxu0 0.0
        %1267 = vmatpush1.msra.mxu0 0.0
        %1268 = vmatprep.subr.mxu0 0.0
        %1269 = vmatpush1.msra.mxu0 0.0
        %1270 = vmatprep.subr.mxu0 0.0
        %1271 = vmatpush1.msra.mxu0 0.0
        %1272 = vmatprep.subr.mxu0 0.0
        %1273 = vmatpush1.msra.mxu0 0.0
        %1274 = vmatprep.subr.mxu0 0.0
        %1275 = vmatpush1.msra.mxu0 0.0
        %1276 = vmatprep.subr.mxu0 0.0
        %1277 = vmatpush1.msra.mxu0 0.0
        %1278 = vmatprep.subr.mxu0 0.0
        %1279 = vmatpush1.msra.mxu0 0.0
        %1280 = vmatprep.subr.mxu0 0.0
        %1281 = vmatpush1.msra.mxu0 0.0
        %1282 = vmatprep.subr.mxu0 0.0
        %1283 = vmatpush1.msra.mxu0 0.0
        %1284 = vmatprep.subr.mxu0 0.0
        %1285 = vmatpush1.msra.mxu0 0.0
        %1286 = vmatprep.subr.mxu0 0.0
        %1287 = vmatpush1.msra.mxu0 0.0
        %1288 = vmatprep.subr.mxu0 0.0
        %1289 = vmatpush1.msra.mxu0 0.0
        %1290 = vmatprep.mubr.f32.mxu0 0.0
        %1291 = vmatmul.mubr.f32.gmra.mrb[0].mxu0 %v864
        %v1292 = vpop.f32.mrb[0].mxu0
        %v1293 = vadd.f32 %v825, %v1292
        %v1294 = vpop.f32.mrb[0].mxu0
        %v1295 = vadd.f32 %v825, %v1294
        %1296 = vmatprep.mubr.f32.mxu0 0.0
        %1297 = vmatmul.mubr.f32.gmra.mrb[0].mxu0 %v867
        %v1298 = vpop.f32.mrb[0].mxu0
        %v1299 = vadd.f32 %v830, %v1298
        %v1300 = vpop.f32.mrb[0].mxu0
        %v1301 = vadd.f32 %v830, %v1300
        %1302 = vmatprep.mubr.f32.mxu0 0.0
        %1303 = vmatmul.mubr.f32.gmra.mrb[0].mxu0 %v870
        %v1304 = vpop.f32.mrb[0].mxu0
        %v1305 = vadd.f32 %v835, %v1304
        %v1306 = vpop.f32.mrb[0].mxu0
        %v1307 = vadd.f32 %v835, %v1306
        %1308 = vmatprep.mubr.f32.mxu0 0.0
        %1309 = vmatmul.mubr.f32.gmra.mrb[0].mxu0 %v873
        %v1310 = vpop.f32.mrb[0].mxu0
        %v1311 = vadd.f32 %v840, %v1310
        %v1312 = vpop.f32.mrb[0].mxu0
        %v1313 = vadd.f32 %v840, %v1312
        %1314 = vmatprep.mubr.f32.mxu0 0.0
        %1315 = vmatmul.mubr.f32.gmra.mrb[0].mxu0 %v876
        %v1316 = vpop.f32.mrb[0].mxu0
        %v1317 = vadd.f32 %v845, %v1316
        %v1318 = vpop.f32.mrb[0].mxu0
        %v1319 = vadd.f32 %v845, %v1318
        %1320 = vmatprep.mubr.f32.mxu0 0.0
        %1321 = vmatmul.mubr.f32.gmra.mrb[0].mxu0 %v879
        %v1322 = vpop.f32.mrb[0].mxu0
        %v1323 = vadd.f32 %v850, %v1322
        %v1324 = vpop.f32.mrb[0].mxu0
        %v1325 = vadd.f32 %v850, %v1324
        %1326 = vmatprep.mubr.f32.mxu0 0.0
        %1327 = vmatmul.mubr.f32.gmra.mrb[0].mxu0 %v882
        %v1328 = vpop.f32.mrb[0].mxu0
        %v1329 = vadd.f32 %v855, %v1328
        %v1330 = vpop.f32.mrb[0].mxu0
        %v1331 = vadd.f32 %v855, %v1330
        %1332 = vmatprep.mubr.f32.mxu0 0.0
        %1333 = vmatmul.mubr.f32.gmra.mrb[0].mxu0 %v885
        %v1334 = vpop.f32.mrb[0].mxu0
        %v1335 = vadd.f32 %v860, %v1334
        %v1336 = vpop.f32.mrb[0].mxu0
        %v1337 = vadd.f32 %v860, %v1336
        %1338 = vdwg.mxu0
        %v1339 = vmax.f32 %v954, 0.0
        %v1340 = vmax.f32 %v956, 0.0
        %v1341 = vmax.f32 %v1067, 0.0
        %v1342 = vmax.f32 %v1069, 0.0
        %v1343 = vmax.f32 %v1180, 0.0
        %v1344 = vmax.f32 %v1182, 0.0
        %v1345 = vmax.f32 %v1293, 0.0
        %v1346 = vmax.f32 %v1295, 0.0
        %v1347 = vmax.f32 %v960, 0.0
        %v1348 = vmax.f32 %v962, 0.0
        %v1349 = vmax.f32 %v1073, 0.0
        %v1350 = vmax.f32 %v1075, 0.0
        %v1351 = vmax.f32 %v1186, 0.0
        %v1352 = vmax.f32 %v1188, 0.0
        %v1353 = vmax.f32 %v1299, 0.0
        %v1354 = vmax.f32 %v1301, 0.0
        %v1355 = vmax.f32 %v966, 0.0
        %v1356 = vmax.f32 %v968, 0.0
        %v1357 = vmax.f32 %v1079, 0.0
        %v1358 = vmax.f32 %v1081, 0.0
        %v1359 = vmax.f32 %v1192, 0.0
        %v1360 = vmax.f32 %v1194, 0.0
        %v1361 = vmax.f32 %v1305, 0.0
        %v1362 = vmax.f32 %v1307, 0.0
        %v1363 = vmax.f32 %v972, 0.0
        %v1364 = vmax.f32 %v974, 0.0
        %v1365 = vmax.f32 %v1085, 0.0
        %v1366 = vmax.f32 %v1087, 0.0
        %v1367 = vmax.f32 %v1198, 0.0
        %v1368 = vmax.f32 %v1200, 0.0
        %v1369 = vmax.f32 %v1311, 0.0
        %v1370 = vmax.f32 %v1313, 0.0
        %v1371 = vmax.f32 %v978, 0.0
        %v1372 = vmax.f32 %v980, 0.0
        %v1373 = vmax.f32 %v1091, 0.0
        %v1374 = vmax.f32 %v1093, 0.0
        %v1375 = vmax.f32 %v1204, 0.0
        %v1376 = vmax.f32 %v1206, 0.0
        %v1377 = vmax.f32 %v1317, 0.0
        %v1378 = vmax.f32 %v1319, 0.0
        %v1379 = vmax.f32 %v984, 0.0
        %v1380 = vmax.f32 %v986, 0.0
        %v1381 = vmax.f32 %v1097, 0.0
        %v1382 = vmax.f32 %v1099, 0.0
        %v1383 = vmax.f32 %v1210, 0.0
        %v1384 = vmax.f32 %v1212, 0.0
        %v1385 = vmax.f32 %v1323, 0.0
        %v1386 = vmax.f32 %v1325, 0.0
        %v1387 = vmax.f32 %v990, 0.0
        %v1388 = vmax.f32 %v992, 0.0
        %v1389 = vmax.f32 %v1103, 0.0
        %v1390 = vmax.f32 %v1105, 0.0
        %v1391 = vmax.f32 %v1216, 0.0
        %v1392 = vmax.f32 %v1218, 0.0
        %v1393 = vmax.f32 %v1329, 0.0
        %v1394 = vmax.f32 %v1331, 0.0
        %v1395 = vmax.f32 %v996, 0.0
        %v1396 = vmax.f32 %v998, 0.0
        %v1397 = vmax.f32 %v1109, 0.0
        %v1398 = vmax.f32 %v1111, 0.0
        %v1399 = vmax.f32 %v1222, 0.0
        %v1400 = vmax.f32 %v1224, 0.0
        %v1401 = vmax.f32 %v1335, 0.0
        %v1402 = vmax.f32 %v1337, 0.0
        %v1403 = vlaneseq
        %v1404 = vand.u32 %v1403, 127
        %v1405 = vadd.s32 %v1404, 128
        %v1406 = vadd.s32 %v1404, 256
        %v1407 = vadd.s32 %v1404, 384
        %v1408 = vadd.s32 %v1404, 512
        %v1409 = vadd.s32 %v1404, 640
        %v1410 = vadd.s32 %v1404, 768
        %v1411 = vadd.s32 %v1404, 896
        %s1412 = smul.u32 %s30, 1024
        %v1413 = vstv %s1412
        %v1414 = vadd.s32 %v1413, %v1404
        %v1415 = vadd.s32 %v1413, %v1405
        %v1416 = vadd.s32 %v1413, %v1406
        %v1417 = vadd.s32 %v1413, %v1407
        %v1418 = vadd.s32 %v1413, %v1408
        %v1419 = vadd.s32 %v1413, %v1409
        %v1420 = vadd.s32 %v1413, %v1410
        %v1421 = vadd.s32 %v1413, %v1411
        %vm1422 = vcmp.lt.s32.totalorder %v1414, 1200
        %vm1423 = vcmp.lt.s32.totalorder %v1415, 1200
        %vm1424 = vcmp.lt.s32.totalorder %v1416, 1200
        %vm1425 = vcmp.lt.s32.totalorder %v1417, 1200
        %vm1426 = vcmp.lt.s32.totalorder %v1418, 1200
        %vm1427 = vcmp.lt.s32.totalorder %v1419, 1200
        %vm1428 = vcmp.lt.s32.totalorder %v1420, 1200
        %vm1429 = vcmp.lt.s32.totalorder %v1421, 1200
        %v1430 = vsel %vm1422, %v1339, 0.0
        %v1431 = vsel %vm1423, %v1340, 0.0
        %v1432 = vsel %vm1424, %v1341, 0.0
        %v1433 = vsel %vm1425, %v1342, 0.0
        %v1434 = vsel %vm1426, %v1343, 0.0
        %v1435 = vsel %vm1427, %v1344, 0.0
        %v1436 = vsel %vm1428, %v1345, 0.0
        %v1437 = vsel %vm1429, %v1346, 0.0
        %v1438 = vsel %vm1422, %v1347, 0.0
        %v1439 = vsel %vm1423, %v1348, 0.0
        %v1440 = vsel %vm1424, %v1349, 0.0
        %v1441 = vsel %vm1425, %v1350, 0.0
        %v1442 = vsel %vm1426, %v1351, 0.0
        %v1443 = vsel %vm1427, %v1352, 0.0
        %v1444 = vsel %vm1428, %v1353, 0.0
        %v1445 = vsel %vm1429, %v1354, 0.0
        %v1446 = vsel %vm1422, %v1355, 0.0
        %v1447 = vsel %vm1423, %v1356, 0.0
        %v1448 = vsel %vm1424, %v1357, 0.0
        %v1449 = vsel %vm1425, %v1358, 0.0
        %v1450 = vsel %vm1426, %v1359, 0.0
        %v1451 = vsel %vm1427, %v1360, 0.0
        %v1452 = vsel %vm1428, %v1361, 0.0
        %v1453 = vsel %vm1429, %v1362, 0.0
        %v1454 = vsel %vm1422, %v1363, 0.0
        %v1455 = vsel %vm1423, %v1364, 0.0
        %v1456 = vsel %vm1424, %v1365, 0.0
        %v1457 = vsel %vm1425, %v1366, 0.0
        %v1458 = vsel %vm1426, %v1367, 0.0
        %v1459 = vsel %vm1427, %v1368, 0.0
        %v1460 = vsel %vm1428, %v1369, 0.0
        %v1461 = vsel %vm1429, %v1370, 0.0
        %v1462 = vsel %vm1422, %v1371, 0.0
        %v1463 = vsel %vm1423, %v1372, 0.0
        %v1464 = vsel %vm1424, %v1373, 0.0
        %v1465 = vsel %vm1425, %v1374, 0.0
        %v1466 = vsel %vm1426, %v1375, 0.0
        %v1467 = vsel %vm1427, %v1376, 0.0
        %v1468 = vsel %vm1428, %v1377, 0.0
        %v1469 = vsel %vm1429, %v1378, 0.0
        %v1470 = vsel %vm1422, %v1379, 0.0
        %v1471 = vsel %vm1423, %v1380, 0.0
        %v1472 = vsel %vm1424, %v1381, 0.0
        %v1473 = vsel %vm1425, %v1382, 0.0
        %v1474 = vsel %vm1426, %v1383, 0.0
        %v1475 = vsel %vm1427, %v1384, 0.0
        %v1476 = vsel %vm1428, %v1385, 0.0
        %v1477 = vsel %vm1429, %v1386, 0.0
        %v1478 = vsel %vm1422, %v1387, 0.0
        %v1479 = vsel %vm1423, %v1388, 0.0
        %v1480 = vsel %vm1424, %v1389, 0.0
        %v1481 = vsel %vm1425, %v1390, 0.0
        %v1482 = vsel %vm1426, %v1391, 0.0
        %v1483 = vsel %vm1427, %v1392, 0.0
        %v1484 = vsel %vm1428, %v1393, 0.0
        %v1485 = vsel %vm1429, %v1394, 0.0
        %v1486 = vsel %vm1422, %v1395, 0.0
        %v1487 = vsel %vm1423, %v1396, 0.0
        %v1488 = vsel %vm1424, %v1397, 0.0
        %v1489 = vsel %vm1425, %v1398, 0.0
        %v1490 = vsel %vm1426, %v1399, 0.0
        %v1491 = vsel %vm1427, %v1400, 0.0
        %v1492 = vsel %vm1428, %v1401, 0.0
        %v1493 = vsel %vm1429, %v1402, 0.0
        %p1494 = scmp.eq.s32.totalorder %s30, 0
        // Predicated region
        $region65: #{tpu_custom_call.1} parent=63 // pred_check
          %p1495 = pneg %p1494
        $region66: #{tpu_custom_call.1} parent=63 // pred_check_branch
          %1497 = sbr.rel (%p1495) target = $region68
        $region67: #{tpu_custom_call.1} parent=63 // pred_region
          %1498 = vst [vmem:[#allocation2] sm:$0xff] %v1430
          %1499 = vst [vmem:[#allocation2 + $0x8] sm:$0xff] %v1431
          %1500 = vst [vmem:[#allocation2 + $0x10] sm:$0xff] %v1432
          %1501 = vst [vmem:[#allocation2 + $0x18] sm:$0xff] %v1433
          %1502 = vst [vmem:[#allocation2 + $0x20] sm:$0xff] %v1434
          %1503 = vst [vmem:[#allocation2 + $0x28] sm:$0xff] %v1435
          %1504 = vst [vmem:[#allocation2 + $0x30] sm:$0xff] %v1436
          %1505 = vst [vmem:[#allocation2 + $0x38] sm:$0xff] %v1437
          %1506 = vst [vmem:[#allocation2 + $0x40] sm:$0xff] %v1438
          %1507 = vst [vmem:[#allocation2 + $0x48] sm:$0xff] %v1439
          %1508 = vst [vmem:[#allocation2 + $0x50] sm:$0xff] %v1440
          %1509 = vst [vmem:[#allocation2 + $0x58] sm:$0xff] %v1441
          %1510 = vst [vmem:[#allocation2 + $0x60] sm:$0xff] %v1442
          %1511 = vst [vmem:[#allocation2 + $0x68] sm:$0xff] %v1443
          %1512 = vst [vmem:[#allocation2 + $0x70] sm:$0xff] %v1444
          %1513 = vst [vmem:[#allocation2 + $0x78] sm:$0xff] %v1445
          %1514 = vst [vmem:[#allocation2 + $0x80] sm:$0xff] %v1446
          %1515 = vst [vmem:[#allocation2 + $0x88] sm:$0xff] %v1447
          %1516 = vst [vmem:[#allocation2 + $0x90] sm:$0xff] %v1448
          %1517 = vst [vmem:[#allocation2 + $0x98] sm:$0xff] %v1449
          %1518 = vst [vmem:[#allocation2 + $0xa0] sm:$0xff] %v1450
          %1519 = vst [vmem:[#allocation2 + $0xa8] sm:$0xff] %v1451
          %1520 = vst [vmem:[#allocation2 + $0xb0] sm:$0xff] %v1452
          %1521 = vst [vmem:[#allocation2 + $0xb8] sm:$0xff] %v1453
          %1522 = vst [vmem:[#allocation2 + $0xc0] sm:$0xff] %v1454
          %1523 = vst [vmem:[#allocation2 + $0xc8] sm:$0xff] %v1455
          %1524 = vst [vmem:[#allocation2 + $0xd0] sm:$0xff] %v1456
          %1525 = vst [vmem:[#allocation2 + $0xd8] sm:$0xff] %v1457
          %1526 = vst [vmem:[#allocation2 + $0xe0] sm:$0xff] %v1458
          %1527 = vst [vmem:[#allocation2 + $0xe8] sm:$0xff] %v1459
          %1528 = vst [vmem:[#allocation2 + $0xf0] sm:$0xff] %v1460
          %1529 = vst [vmem:[#allocation2 + $0xf8] sm:$0xff] %v1461
          %1530 = vst [vmem:[#allocation2 + $0x100] sm:$0xff] %v1462
          %1531 = vst [vmem:[#allocation2 + $0x108] sm:$0xff] %v1463
          %1532 = vst [vmem:[#allocation2 + $0x110] sm:$0xff] %v1464
          %1533 = vst [vmem:[#allocation2 + $0x118] sm:$0xff] %v1465
          %1534 = vst [vmem:[#allocation2 + $0x120] sm:$0xff] %v1466
          %1535 = vst [vmem:[#allocation2 + $0x128] sm:$0xff] %v1467
          %1536 = vst [vmem:[#allocation2 + $0x130] sm:$0xff] %v1468
          %1537 = vst [vmem:[#allocation2 + $0x138] sm:$0xff] %v1469
          %1538 = vst [vmem:[#allocation2 + $0x140] sm:$0xff] %v1470
          %1539 = vst [vmem:[#allocation2 + $0x148] sm:$0xff] %v1471
          %1540 = vst [vmem:[#allocation2 + $0x150] sm:$0xff] %v1472
          %1541 = vst [vmem:[#allocation2 + $0x158] sm:$0xff] %v1473
          %1542 = vst [vmem:[#allocation2 + $0x160] sm:$0xff] %v1474
          %1543 = vst [vmem:[#allocation2 + $0x168] sm:$0xff] %v1475
          %1544 = vst [vmem:[#allocation2 + $0x170] sm:$0xff] %v1476
          %1545 = vst [vmem:[#allocation2 + $0x178] sm:$0xff] %v1477
          %1546 = vst [vmem:[#allocation2 + $0x180] sm:$0xff] %v1478
          %1547 = vst [vmem:[#allocation2 + $0x188] sm:$0xff] %v1479
          %1548 = vst [vmem:[#allocation2 + $0x190] sm:$0xff] %v1480
          %1549 = vst [vmem:[#allocation2 + $0x198] sm:$0xff] %v1481
          %1550 = vst [vmem:[#allocation2 + $0x1a0] sm:$0xff] %v1482
          %1551 = vst [vmem:[#allocation2 + $0x1a8] sm:$0xff] %v1483
          %1552 = vst [vmem:[#allocation2 + $0x1b0] sm:$0xff] %v1484
          %1553 = vst [vmem:[#allocation2 + $0x1b8] sm:$0xff] %v1485
          %1554 = vst [vmem:[#allocation2 + $0x1c0] sm:$0xff] %v1486
          %1555 = vst [vmem:[#allocation2 + $0x1c8] sm:$0xff] %v1487
          %1556 = vst [vmem:[#allocation2 + $0x1d0] sm:$0xff] %v1488
          %1557 = vst [vmem:[#allocation2 + $0x1d8] sm:$0xff] %v1489
          %1558 = vst [vmem:[#allocation2 + $0x1e0] sm:$0xff] %v1490
          %1559 = vst [vmem:[#allocation2 + $0x1e8] sm:$0xff] %v1491
          %1560 = vst [vmem:[#allocation2 + $0x1f0] sm:$0xff] %v1492
          %1561 = vst [vmem:[#allocation2 + $0x1f8] sm:$0xff] %v1493
        $region68: #{tpu_custom_call.1} parent=63 // pred_fallthru
          _
        %p1562 = scmp.ne.s32.totalorder %s30, 0
        // Predicated region
        $region69: #{tpu_custom_call.1} parent=63 // pred_check
          %p1563 = pneg %p1562
        $region70: #{tpu_custom_call.1} parent=63 // pred_check_branch
          %1565 = sbr.rel (%p1563) target = $region72
        $region71: #{tpu_custom_call.1} parent=63 // pred_region
          %v1566 = vld [vmem:[#allocation2] sm:$0xff]
          %v1567 = vld [vmem:[#allocation2 + $0x8] sm:$0xff]
          %v1568 = vld [vmem:[#allocation2 + $0x10] sm:$0xff]
          %v1569 = vld [vmem:[#allocation2 + $0x18] sm:$0xff]
          %v1570 = vld [vmem:[#allocation2 + $0x20] sm:$0xff]
          %v1571 = vld [vmem:[#allocation2 + $0x28] sm:$0xff]
          %v1572 = vld [vmem:[#allocation2 + $0x30] sm:$0xff]
          %v1573 = vld [vmem:[#allocation2 + $0x38] sm:$0xff]
          %v1574 = vld [vmem:[#allocation2 + $0x40] sm:$0xff]
          %v1575 = vld [vmem:[#allocation2 + $0x48] sm:$0xff]
          %v1576 = vld [vmem:[#allocation2 + $0x50] sm:$0xff]
          %v1577 = vld [vmem:[#allocation2 + $0x58] sm:$0xff]
          %v1578 = vld [vmem:[#allocation2 + $0x60] sm:$0xff]
          %v1579 = vld [vmem:[#allocation2 + $0x68] sm:$0xff]
          %v1580 = vld [vmem:[#allocation2 + $0x70] sm:$0xff]
          %v1581 = vld [vmem:[#allocation2 + $0x78] sm:$0xff]
          %v1582 = vld [vmem:[#allocation2 + $0x80] sm:$0xff]
          %v1583 = vld [vmem:[#allocation2 + $0x88] sm:$0xff]
          %v1584 = vld [vmem:[#allocation2 + $0x90] sm:$0xff]
          %v1585 = vld [vmem:[#allocation2 + $0x98] sm:$0xff]
          %v1586 = vld [vmem:[#allocation2 + $0xa0] sm:$0xff]
          %v1587 = vld [vmem:[#allocation2 + $0xa8] sm:$0xff]
          %v1588 = vld [vmem:[#allocation2 + $0xb0] sm:$0xff]
          %v1589 = vld [vmem:[#allocation2 + $0xb8] sm:$0xff]
          %v1590 = vld [vmem:[#allocation2 + $0xc0] sm:$0xff]
          %v1591 = vld [vmem:[#allocation2 + $0xc8] sm:$0xff]
          %v1592 = vld [vmem:[#allocation2 + $0xd0] sm:$0xff]
          %v1593 = vld [vmem:[#allocation2 + $0xd8] sm:$0xff]
          %v1594 = vld [vmem:[#allocation2 + $0xe0] sm:$0xff]
          %v1595 = vld [vmem:[#allocation2 + $0xe8] sm:$0xff]
          %v1596 = vld [vmem:[#allocation2 + $0xf0] sm:$0xff]
          %v1597 = vld [vmem:[#allocation2 + $0xf8] sm:$0xff]
          %v1598 = vld [vmem:[#allocation2 + $0x100] sm:$0xff]
          %v1599 = vld [vmem:[#allocation2 + $0x108] sm:$0xff]
          %v1600 = vld [vmem:[#allocation2 + $0x110] sm:$0xff]
          %v1601 = vld [vmem:[#allocation2 + $0x118] sm:$0xff]
          %v1602 = vld [vmem:[#allocation2 + $0x120] sm:$0xff]
          %v1603 = vld [vmem:[#allocation2 + $0x128] sm:$0xff]
          %v1604 = vld [vmem:[#allocation2 + $0x130] sm:$0xff]
          %v1605 = vld [vmem:[#allocation2 + $0x138] sm:$0xff]
          %v1606 = vld [vmem:[#allocation2 + $0x140] sm:$0xff]
          %v1607 = vld [vmem:[#allocation2 + $0x148] sm:$0xff]
          %v1608 = vld [vmem:[#allocation2 + $0x150] sm:$0xff]
          %v1609 = vld [vmem:[#allocation2 + $0x158] sm:$0xff]
          %v1610 = vld [vmem:[#allocation2 + $0x160] sm:$0xff]
          %v1611 = vld [vmem:[#allocation2 + $0x168] sm:$0xff]
          %v1612 = vld [vmem:[#allocation2 + $0x170] sm:$0xff]
          %v1613 = vld [vmem:[#allocation2 + $0x178] sm:$0xff]
          %v1614 = vld [vmem:[#allocation2 + $0x180] sm:$0xff]
          %v1615 = vld [vmem:[#allocation2 + $0x188] sm:$0xff]
          %v1616 = vld [vmem:[#allocation2 + $0x190] sm:$0xff]
          %v1617 = vld [vmem:[#allocation2 + $0x198] sm:$0xff]
          %v1618 = vld [vmem:[#allocation2 + $0x1a0] sm:$0xff]
          %v1619 = vld [vmem:[#allocation2 + $0x1a8] sm:$0xff]
          %v1620 = vld [vmem:[#allocation2 + $0x1b0] sm:$0xff]
          %v1621 = vld [vmem:[#allocation2 + $0x1b8] sm:$0xff]
          %v1622 = vld [vmem:[#allocation2 + $0x1c0] sm:$0xff]
          %v1623 = vld [vmem:[#allocation2 + $0x1c8] sm:$0xff]
          %v1624 = vld [vmem:[#allocation2 + $0x1d0] sm:$0xff]
          %v1625 = vld [vmem:[#allocation2 + $0x1d8] sm:$0xff]
          %v1626 = vld [vmem:[#allocation2 + $0x1e0] sm:$0xff]
          %v1627 = vld [vmem:[#allocation2 + $0x1e8] sm:$0xff]
          %v1628 = vld [vmem:[#allocation2 + $0x1f0] sm:$0xff]
          %v1629 = vld [vmem:[#allocation2 + $0x1f8] sm:$0xff]
          %v1630 = vmax.f32 %v1566, %v1430
          %v1631 = vmax.f32 %v1567, %v1431
          %v1632 = vmax.f32 %v1568, %v1432
          %v1633 = vmax.f32 %v1569, %v1433
          %v1634 = vmax.f32 %v1570, %v1434
          %v1635 = vmax.f32 %v1571, %v1435
          %v1636 = vmax.f32 %v1572, %v1436
          %v1637 = vmax.f32 %v1573, %v1437
          %v1638 = vmax.f32 %v1574, %v1438
          %v1639 = vmax.f32 %v1575, %v1439
          %v1640 = vmax.f32 %v1576, %v1440
          %v1641 = vmax.f32 %v1577, %v1441
          %v1642 = vmax.f32 %v1578, %v1442
          %v1643 = vmax.f32 %v1579, %v1443
          %v1644 = vmax.f32 %v1580, %v1444
          %v1645 = vmax.f32 %v1581, %v1445
          %v1646 = vmax.f32 %v1582, %v1446
          %v1647 = vmax.f32 %v1583, %v1447
          %v1648 = vmax.f32 %v1584, %v1448
          %v1649 = vmax.f32 %v1585, %v1449
          %v1650 = vmax.f32 %v1586, %v1450
          %v1651 = vmax.f32 %v1587, %v1451
          %v1652 = vmax.f32 %v1588, %v1452
          %v1653 = vmax.f32 %v1589, %v1453
          %v1654 = vmax.f32 %v1590, %v1454
          %v1655 = vmax.f32 %v1591, %v1455
          %v1656 = vmax.f32 %v1592, %v1456
          %v1657 = vmax.f32 %v1593, %v1457
          %v1658 = vmax.f32 %v1594, %v1458
          %v1659 = vmax.f32 %v1595, %v1459
          %v1660 = vmax.f32 %v1596, %v1460
          %v1661 = vmax.f32 %v1597, %v1461
          %v1662 = vmax.f32 %v1598, %v1462
          %v1663 = vmax.f32 %v1599, %v1463
          %v1664 = vmax.f32 %v1600, %v1464
          %v1665 = vmax.f32 %v1601, %v1465
          %v1666 = vmax.f32 %v1602, %v1466
          %v1667 = vmax.f32 %v1603, %v1467
          %v1668 = vmax.f32 %v1604, %v1468
          %v1669 = vmax.f32 %v1605, %v1469
          %v1670 = vmax.f32 %v1606, %v1470
          %v1671 = vmax.f32 %v1607, %v1471
          %v1672 = vmax.f32 %v1608, %v1472
          %v1673 = vmax.f32 %v1609, %v1473
          %v1674 = vmax.f32 %v1610, %v1474
          %v1675 = vmax.f32 %v1611, %v1475
          %v1676 = vmax.f32 %v1612, %v1476
          %v1677 = vmax.f32 %v1613, %v1477
          %v1678 = vmax.f32 %v1614, %v1478
          %v1679 = vmax.f32 %v1615, %v1479
          %v1680 = vmax.f32 %v1616, %v1480
          %v1681 = vmax.f32 %v1617, %v1481
          %v1682 = vmax.f32 %v1618, %v1482
          %v1683 = vmax.f32 %v1619, %v1483
          %v1684 = vmax.f32 %v1620, %v1484
          %v1685 = vmax.f32 %v1621, %v1485
          %v1686 = vmax.f32 %v1622, %v1486
          %v1687 = vmax.f32 %v1623, %v1487
          %v1688 = vmax.f32 %v1624, %v1488
          %v1689 = vmax.f32 %v1625, %v1489
          %v1690 = vmax.f32 %v1626, %v1490
          %v1691 = vmax.f32 %v1627, %v1491
          %v1692 = vmax.f32 %v1628, %v1492
          %v1693 = vmax.f32 %v1629, %v1493
          %1694 = vst [vmem:[#allocation2] sm:$0xff] %v1630
          %1695 = vst [vmem:[#allocation2 + $0x8] sm:$0xff] %v1631
          %1696 = vst [vmem:[#allocation2 + $0x10] sm:$0xff] %v1632
          %1697 = vst [vmem:[#allocation2 + $0x18] sm:$0xff] %v1633
          %1698 = vst [vmem:[#allocation2 + $0x20] sm:$0xff] %v1634
          %1699 = vst [vmem:[#allocation2 + $0x28] sm:$0xff] %v1635
          %1700 = vst [vmem:[#allocation2 + $0x30] sm:$0xff] %v1636
          %1701 = vst [vmem:[#allocation2 + $0x38] sm:$0xff] %v1637
          %1702 = vst [vmem:[#allocation2 + $0x40] sm:$0xff] %v1638
          %1703 = vst [vmem:[#allocation2 + $0x48] sm:$0xff] %v1639
          %1704 = vst [vmem:[#allocation2 + $0x50] sm:$0xff] %v1640
          %1705 = vst [vmem:[#allocation2 + $0x58] sm:$0xff] %v1641
          %1706 = vst [vmem:[#allocation2 + $0x60] sm:$0xff] %v1642
          %1707 = vst [vmem:[#allocation2 + $0x68] sm:$0xff] %v1643
          %1708 = vst [vmem:[#allocation2 + $0x70] sm:$0xff] %v1644
          %1709 = vst [vmem:[#allocation2 + $0x78] sm:$0xff] %v1645
          %1710 = vst [vmem:[#allocation2 + $0x80] sm:$0xff] %v1646
          %1711 = vst [vmem:[#allocation2 + $0x88] sm:$0xff] %v1647
          %1712 = vst [vmem:[#allocation2 + $0x90] sm:$0xff] %v1648
          %1713 = vst [vmem:[#allocation2 + $0x98] sm:$0xff] %v1649
          %1714 = vst [vmem:[#allocation2 + $0xa0] sm:$0xff] %v1650
          %1715 = vst [vmem:[#allocation2 + $0xa8] sm:$0xff] %v1651
          %1716 = vst [vmem:[#allocation2 + $0xb0] sm:$0xff] %v1652
          %1717 = vst [vmem:[#allocation2 + $0xb8] sm:$0xff] %v1653
          %1718 = vst [vmem:[#allocation2 + $0xc0] sm:$0xff] %v1654
          %1719 = vst [vmem:[#allocation2 + $0xc8] sm:$0xff] %v1655
          %1720 = vst [vmem:[#allocation2 + $0xd0] sm:$0xff] %v1656
          %1721 = vst [vmem:[#allocation2 + $0xd8] sm:$0xff] %v1657
          %1722 = vst [vmem:[#allocation2 + $0xe0] sm:$0xff] %v1658
          %1723 = vst [vmem:[#allocation2 + $0xe8] sm:$0xff] %v1659
          %1724 = vst [vmem:[#allocation2 + $0xf0] sm:$0xff] %v1660
          %1725 = vst [vmem:[#allocation2 + $0xf8] sm:$0xff] %v1661
          %1726 = vst [vmem:[#allocation2 + $0x100] sm:$0xff] %v1662
          %1727 = vst [vmem:[#allocation2 + $0x108] sm:$0xff] %v1663
          %1728 = vst [vmem:[#allocation2 + $0x110] sm:$0xff] %v1664
          %1729 = vst [vmem:[#allocation2 + $0x118] sm:$0xff] %v1665
          %1730 = vst [vmem:[#allocation2 + $0x120] sm:$0xff] %v1666
          %1731 = vst [vmem:[#allocation2 + $0x128] sm:$0xff] %v1667
          %1732 = vst [vmem:[#allocation2 + $0x130] sm:$0xff] %v1668
          %1733 = vst [vmem:[#allocation2 + $0x138] sm:$0xff] %v1669
          %1734 = vst [vmem:[#allocation2 + $0x140] sm:$0xff] %v1670
          %1735 = vst [vmem:[#allocation2 + $0x148] sm:$0xff] %v1671
          %1736 = vst [vmem:[#allocation2 + $0x150] sm:$0xff] %v1672
          %1737 = vst [vmem:[#allocation2 + $0x158] sm:$0xff] %v1673
          %1738 = vst [vmem:[#allocation2 + $0x160] sm:$0xff] %v1674
          %1739 = vst [vmem:[#allocation2 + $0x168] sm:$0xff] %v1675
          %1740 = vst [vmem:[#allocation2 + $0x170] sm:$0xff] %v1676
          %1741 = vst [vmem:[#allocation2 + $0x178] sm:$0xff] %v1677
          %1742 = vst [vmem:[#allocation2 + $0x180] sm:$0xff] %v1678
          %1743 = vst [vmem:[#allocation2 + $0x188] sm:$0xff] %v1679
          %1744 = vst [vmem:[#allocation2 + $0x190] sm:$0xff] %v1680
          %1745 = vst [vmem:[#allocation2 + $0x198] sm:$0xff] %v1681
          %1746 = vst [vmem:[#allocation2 + $0x1a0] sm:$0xff] %v1682
          %1747 = vst [vmem:[#allocation2 + $0x1a8] sm:$0xff] %v1683
          %1748 = vst [vmem:[#allocation2 + $0x1b0] sm:$0xff] %v1684
          %1749 = vst [vmem:[#allocation2 + $0x1b8] sm:$0xff] %v1685
          %1750 = vst [vmem:[#allocation2 + $0x1c0] sm:$0xff] %v1686
          %1751 = vst [vmem:[#allocation2 + $0x1c8] sm:$0xff] %v1687
          %1752 = vst [vmem:[#allocation2 + $0x1d0] sm:$0xff] %v1688
          %1753 = vst [vmem:[#allocation2 + $0x1d8] sm:$0xff] %v1689
          %1754 = vst [vmem:[#allocation2 + $0x1e0] sm:$0xff] %v1690
          %1755 = vst [vmem:[#allocation2 + $0x1e8] sm:$0xff] %v1691
          %1756 = vst [vmem:[#allocation2 + $0x1f0] sm:$0xff] %v1692
          %1757 = vst [vmem:[#allocation2 + $0x1f8] sm:$0xff] %v1693
        $region72: #{tpu_custom_call.1} parent=63 // pred_fallthru
          _
        %p1758 = scmp.eq.s32.totalorder %s30, 1
        // Predicated region
        $region73: #{tpu_custom_call.1} parent=63 // pred_check
          %p1759 = pneg %p1758
        $region74: #{tpu_custom_call.1} parent=63 // pred_check_branch
          %1761 = sbr.rel (%p1759) target = $region76
        $region75: #{tpu_custom_call.1} parent=63 // pred_region
          %v1762 = vld [vmem:[#allocation2] sm:$0xff]
          %v1763 = vld [vmem:[#allocation2 + $0x8] sm:$0xff]
          %v1764 = vld [vmem:[#allocation2 + $0x10] sm:$0xff]
          %v1765 = vld [vmem:[#allocation2 + $0x18] sm:$0xff]
          %v1766 = vld [vmem:[#allocation2 + $0x20] sm:$0xff]
          %v1767 = vld [vmem:[#allocation2 + $0x28] sm:$0xff]
          %v1768 = vld [vmem:[#allocation2 + $0x30] sm:$0xff]
          %v1769 = vld [vmem:[#allocation2 + $0x38] sm:$0xff]
          %v1770 = vld [vmem:[#allocation2 + $0x40] sm:$0xff]
          %v1771 = vld [vmem:[#allocation2 + $0x48] sm:$0xff]
          %v1772 = vld [vmem:[#allocation2 + $0x50] sm:$0xff]
          %v1773 = vld [vmem:[#allocation2 + $0x58] sm:$0xff]
          %v1774 = vld [vmem:[#allocation2 + $0x60] sm:$0xff]
          %v1775 = vld [vmem:[#allocation2 + $0x68] sm:$0xff]
          %v1776 = vld [vmem:[#allocation2 + $0x70] sm:$0xff]
          %v1777 = vld [vmem:[#allocation2 + $0x78] sm:$0xff]
          %v1778 = vld [vmem:[#allocation2 + $0x80] sm:$0xff]
          %v1779 = vld [vmem:[#allocation2 + $0x88] sm:$0xff]
          %v1780 = vld [vmem:[#allocation2 + $0x90] sm:$0xff]
          %v1781 = vld [vmem:[#allocation2 + $0x98] sm:$0xff]
          %v1782 = vld [vmem:[#allocation2 + $0xa0] sm:$0xff]
          %v1783 = vld [vmem:[#allocation2 + $0xa8] sm:$0xff]
          %v1784 = vld [vmem:[#allocation2 + $0xb0] sm:$0xff]
          %v1785 = vld [vmem:[#allocation2 + $0xb8] sm:$0xff]
          %v1786 = vld [vmem:[#allocation2 + $0xc0] sm:$0xff]
          %v1787 = vld [vmem:[#allocation2 + $0xc8] sm:$0xff]
          %v1788 = vld [vmem:[#allocation2 + $0xd0] sm:$0xff]
          %v1789 = vld [vmem:[#allocation2 + $0xd8] sm:$0xff]
          %v1790 = vld [vmem:[#allocation2 + $0xe0] sm:$0xff]
          %v1791 = vld [vmem:[#allocation2 + $0xe8] sm:$0xff]
          %v1792 = vld [vmem:[#allocation2 + $0xf0] sm:$0xff]
          %v1793 = vld [vmem:[#allocation2 + $0xf8] sm:$0xff]
          %v1794 = vld [vmem:[#allocation2 + $0x100] sm:$0xff]
          %v1795 = vld [vmem:[#allocation2 + $0x108] sm:$0xff]
          %v1796 = vld [vmem:[#allocation2 + $0x110] sm:$0xff]
          %v1797 = vld [vmem:[#allocation2 + $0x118] sm:$0xff]
          %v1798 = vld [vmem:[#allocation2 + $0x120] sm:$0xff]
          %v1799 = vld [vmem:[#allocation2 + $0x128] sm:$0xff]
          %v1800 = vld [vmem:[#allocation2 + $0x130] sm:$0xff]
          %v1801 = vld [vmem:[#allocation2 + $0x138] sm:$0xff]
          %v1802 = vld [vmem:[#allocation2 + $0x140] sm:$0xff]
          %v1803 = vld [vmem:[#allocation2 + $0x148] sm:$0xff]
          %v1804 = vld [vmem:[#allocation2 + $0x150] sm:$0xff]
          %v1805 = vld [vmem:[#allocation2 + $0x158] sm:$0xff]
          %v1806 = vld [vmem:[#allocation2 + $0x160] sm:$0xff]
          %v1807 = vld [vmem:[#allocation2 + $0x168] sm:$0xff]
          %v1808 = vld [vmem:[#allocation2 + $0x170] sm:$0xff]
          %v1809 = vld [vmem:[#allocation2 + $0x178] sm:$0xff]
          %v1810 = vld [vmem:[#allocation2 + $0x180] sm:$0xff]
          %v1811 = vld [vmem:[#allocation2 + $0x188] sm:$0xff]
          %v1812 = vld [vmem:[#allocation2 + $0x190] sm:$0xff]
          %v1813 = vld [vmem:[#allocation2 + $0x198] sm:$0xff]
          %v1814 = vld [vmem:[#allocation2 + $0x1a0] sm:$0xff]
          %v1815 = vld [vmem:[#allocation2 + $0x1a8] sm:$0xff]
          %v1816 = vld [vmem:[#allocation2 + $0x1b0] sm:$0xff]
          %v1817 = vld [vmem:[#allocation2 + $0x1b8] sm:$0xff]
          %v1818 = vld [vmem:[#allocation2 + $0x1c0] sm:$0xff]
          %v1819 = vld [vmem:[#allocation2 + $0x1c8] sm:$0xff]
          %v1820 = vld [vmem:[#allocation2 + $0x1d0] sm:$0xff]
          %v1821 = vld [vmem:[#allocation2 + $0x1d8] sm:$0xff]
          %v1822 = vld [vmem:[#allocation2 + $0x1e0] sm:$0xff]
          %v1823 = vld [vmem:[#allocation2 + $0x1e8] sm:$0xff]
          %v1824 = vld [vmem:[#allocation2 + $0x1f0] sm:$0xff]
          %v1825 = vld [vmem:[#allocation2 + $0x1f8] sm:$0xff]
          %v1826 = vmax.f32 %v1762, %v1763
          %v1827 = vmax.f32 %v1826, %v1764
          %v1828 = vmax.f32 %v1827, %v1765
          %v1829 = vmax.f32 %v1828, %v1766
          %v1830 = vmax.f32 %v1829, %v1767
          %v1831 = vmax.f32 %v1830, %v1768
          %v1832 = vmax.f32 %v1831, %v1769
          %1833 = vmax.xlane.f32.xlu0 %v1832
          %v1834 = vpop.xlane.xlu0 %1833
          %v1835 = vmax.f32 %v1770, %v1771
          %v1836 = vmax.f32 %v1835, %v1772
          %v1837 = vmax.f32 %v1836, %v1773
          %v1838 = vmax.f32 %v1837, %v1774
          %v1839 = vmax.f32 %v1838, %v1775
          %v1840 = vmax.f32 %v1839, %v1776
          %v1841 = vmax.f32 %v1840, %v1777
          %1842 = vmax.xlane.f32.xlu0 %v1841
          %v1843 = vpop.xlane.xlu0 %1842
          %v1844 = vmax.f32 %v1778, %v1779
          %v1845 = vmax.f32 %v1844, %v1780
          %v1846 = vmax.f32 %v1845, %v1781
          %v1847 = vmax.f32 %v1846, %v1782
          %v1848 = vmax.f32 %v1847, %v1783
          %v1849 = vmax.f32 %v1848, %v1784
          %v1850 = vmax.f32 %v1849, %v1785
          %1851 = vmax.xlane.f32.xlu0 %v1850
          %v1852 = vpop.xlane.xlu0 %1851
          %v1853 = vmax.f32 %v1786, %v1787
          %v1854 = vmax.f32 %v1853, %v1788
          %v1855 = vmax.f32 %v1854, %v1789
          %v1856 = vmax.f32 %v1855, %v1790
          %v1857 = vmax.f32 %v1856, %v1791
          %v1858 = vmax.f32 %v1857, %v1792
          %v1859 = vmax.f32 %v1858, %v1793
          %1860 = vmax.xlane.f32.xlu0 %v1859
          %v1861 = vpop.xlane.xlu0 %1860
          %v1862 = vmax.f32 %v1794, %v1795
          %v1863 = vmax.f32 %v1862, %v1796
          %v1864 = vmax.f32 %v1863, %v1797
          %v1865 = vmax.f32 %v1864, %v1798
          %v1866 = vmax.f32 %v1865, %v1799
          %v1867 = vmax.f32 %v1866, %v1800
          %v1868 = vmax.f32 %v1867, %v1801
          %1869 = vmax.xlane.f32.xlu0 %v1868
          %v1870 = vpop.xlane.xlu0 %1869
          %v1871 = vmax.f32 %v1802, %v1803
          %v1872 = vmax.f32 %v1871, %v1804
          %v1873 = vmax.f32 %v1872, %v1805
          %v1874 = vmax.f32 %v1873, %v1806
          %v1875 = vmax.f32 %v1874, %v1807
          %v1876 = vmax.f32 %v1875, %v1808
          %v1877 = vmax.f32 %v1876, %v1809
          %1878 = vmax.xlane.f32.xlu0 %v1877
          %v1879 = vpop.xlane.xlu0 %1878
          %v1880 = vmax.f32 %v1810, %v1811
          %v1881 = vmax.f32 %v1880, %v1812
          %v1882 = vmax.f32 %v1881, %v1813
          %v1883 = vmax.f32 %v1882, %v1814
          %v1884 = vmax.f32 %v1883, %v1815
          %v1885 = vmax.f32 %v1884, %v1816
          %v1886 = vmax.f32 %v1885, %v1817
          %1887 = vmax.xlane.f32.xlu0 %v1886
          %v1888 = vpop.xlane.xlu0 %1887
          %v1889 = vmax.f32 %v1818, %v1819
          %v1890 = vmax.f32 %v1889, %v1820
          %v1891 = vmax.f32 %v1890, %v1821
          %v1892 = vmax.f32 %v1891, %v1822
          %v1893 = vmax.f32 %v1892, %v1823
          %v1894 = vmax.f32 %v1893, %v1824
          %v1895 = vmax.f32 %v1894, %v1825
          %1896 = vmax.xlane.f32.xlu0 %v1895
          %v1897 = vpop.xlane.xlu0 %1896
          %1898 = vxpose.xlu0.b32.start [1/16] %v1834, 128
          %1899 = vxpose.xlu0.b32.cont [2/16] %v1843, 128
          %1900 = vxpose.xlu0.b32.cont [3/16] %v1852, 128
          %1901 = vxpose.xlu0.b32.cont [4/16] %v1861, 128
          %1902 = vxpose.xlu0.b32.cont [5/16] %v1870, 128
          %1903 = vxpose.xlu0.b32.cont [6/16] %v1879, 128
          %1904 = vxpose.xlu0.b32.cont [7/16] %v1888, 128
          %1905 = vxpose.xlu0.b32.cont [8/16] %v1897, 128
          %1906 = vxpose.xlu0.b32.cont [9/16] 0.0, 128
          %1907 = vxpose.xlu0.b32.cont [10/16] 0.0, 128
          %1908 = vxpose.xlu0.b32.cont [11/16] 0.0, 128
          %1909 = vxpose.xlu0.b32.cont [12/16] 0.0, 128
          %1910 = vxpose.xlu0.b32.cont [13/16] 0.0, 128
          %1911 = vxpose.xlu0.b32.cont [14/16] 0.0, 128
          %1912 = vxpose.xlu0.b32.cont [15/16] 0.0, 128
          %1913 = vxpose.xlu0.b32.end [16/16] 0.0, 128
          %v1914 = vpop.trf.xlu0
          %v1915 = vpop.trf.xlu0
          %v1916 = vpop.trf.xlu0
          %v1917 = vpop.trf.xlu0
          %v1918 = vpop.trf.xlu0
          %v1919 = vpop.trf.xlu0
          %v1920 = vpop.trf.xlu0
          %v1921 = vpop.trf.xlu0
          %v1922 = vpop.trf.xlu0
          %v1923 = vpop.trf.xlu0
          %v1924 = vpop.trf.xlu0
          %v1925 = vpop.trf.xlu0
          %v1926 = vpop.trf.xlu0
          %v1927 = vpop.trf.xlu0
          %v1928 = vpop.trf.xlu0
          %v1929 = vpop.trf.xlu0
          %v1930 = vld [vmem:[%s5] sm:$0xff]
          %v1931 = vld [vmem:[%s5 + $0x8] sm:$0xff]
          %v1932 = vld [vmem:[%s5 + $0x10] sm:$0xff]
          %v1933 = vld [vmem:[%s5 + $0x18] sm:$0xff]
          %v1934 = vld [vmem:[%s5 + $0x20] sm:$0xff]
          %v1935 = vld [vmem:[%s5 + $0x28] sm:$0xff]
          %v1936 = vld [vmem:[%s5 + $0x30] sm:$0xff]
          %v1937 = vld [vmem:[%s5 + $0x38] sm:$0xff]
          %v1938 = vld [vmem:[%s6] sm:$0x1]
          %vm1939 = vcmask 523264
          %v1941 = vsel %vm1939, %v1914, 0
          %1943 = vmatprep.subr.mxu0 0.0
          %1944 = vmatpush1.msra.mxu0 %v1930
          %1945 = vmatprep.subr.mxu0 0.0
          %1946 = vmatpush1.msra.mxu0 %v1931
          %1947 = vmatprep.subr.mxu0 0.0
          %1948 = vmatpush1.msra.mxu0 %v1932
          %1949 = vmatprep.subr.mxu0 0.0
          %1950 = vmatpush1.msra.mxu0 %v1933
          %1951 = vmatprep.subr.mxu0 0.0
          %1952 = vmatpush1.msra.mxu0 %v1934
          %1953 = vmatprep.subr.mxu0 0.0
          %1954 = vmatpush1.msra.mxu0 %v1935
          %1955 = vmatprep.subr.mxu0 0.0
          %1956 = vmatpush1.msra.mxu0 %v1936
          %1957 = vmatprep.subr.mxu0 0.0
          %1958 = vmatpush1.msra.mxu0 %v1937
          %1959 = vmatprep.subr.mxu0 0.0
          %1960 = vmatpush1.msra.mxu0 0.0
          %1961 = vmatprep.subr.mxu0 0.0
          %1962 = vmatpush1.msra.mxu0 0.0
          %1963 = vmatprep.subr.mxu0 0.0
          %1964 = vmatpush1.msra.mxu0 0.0
          %1965 = vmatprep.subr.mxu0 0.0
          %1966 = vmatpush1.msra.mxu0 0.0
          %1967 = vmatprep.subr.mxu0 0.0
          %1968 = vmatpush1.msra.mxu0 0.0
          %1969 = vmatprep.subr.mxu0 0.0
          %1970 = vmatpush1.msra.mxu0 0.0
          %1971 = vmatprep.subr.mxu0 0.0
          %1972 = vmatpush1.msra.mxu0 0.0
          %1973 = vmatprep.subr.mxu0 0.0
          %1974 = vmatpush1.msra.mxu0 0.0
          %1975 = vmatprep.subr.mxu0 0.0
          %1976 = vmatpush1.msra.mxu0 0.0
          %1977 = vmatprep.subr.mxu0 0.0
          %1978 = vmatpush1.msra.mxu0 0.0
          %1979 = vmatprep.subr.mxu0 0.0
          %1980 = vmatpush1.msra.mxu0 0.0
          %1981 = vmatprep.subr.mxu0 0.0
          %1982 = vmatpush1.msra.mxu0 0.0
          %1983 = vmatprep.subr.mxu0 0.0
          %1984 = vmatpush1.msra.mxu0 0.0
          %1985 = vmatprep.subr.mxu0 0.0
          %1986 = vmatpush1.msra.mxu0 0.0
          %1987 = vmatprep.subr.mxu0 0.0
          %1988 = vmatpush1.msra.mxu0 0.0
          %1989 = vmatprep.subr.mxu0 0.0
          %1990 = vmatpush1.msra.mxu0 0.0
          %1991 = vmatprep.subr.mxu0 0.0
          %1992 = vmatpush1.msra.mxu0 0.0
          %1993 = vmatprep.subr.mxu0 0.0
          %1994 = vmatpush1.msra.mxu0 0.0
          %1995 = vmatprep.subr.mxu0 0.0
          %1996 = vmatpush1.msra.mxu0 0.0
          %1997 = vmatprep.subr.mxu0 0.0
          %1998 = vmatpush1.msra.mxu0 0.0
          %1999 = vmatprep.subr.mxu0 0.0
          %2000 = vmatpush1.msra.mxu0 0.0
          %2001 = vmatprep.subr.mxu0 0.0
          %2002 = vmatpush1.msra.mxu0 0.0
          %2003 = vmatprep.subr.mxu0 0.0
          %2004 = vmatpush1.msra.mxu0 0.0
          %2005 = vmatprep.subr.mxu0 0.0
          %2006 = vmatpush1.msra.mxu0 0.0
          %2007 = vmatprep.mubr.f32.mxu0 0.0
          %2008 = vmatmul.mubr.f32.gmra.mrb[0].mxu0 %v1941
          %v2009 = vpop.f32.mrb[0].mxu0
          %v2010 = vadd.f32 %v1938, %v2009
          %v2011 = vpop.f32.mrb[0].mxu0
          %2012 = vdwg.mxu0
          %v2013 = vmax.f32 %v2010, 0.0
          %v2014 = vld [vmem:[%s7] sm:$0xff]
          %v2015 = vld [vmem:[%s7 + $0x8] sm:$0xff]
          %v2016 = vld [vmem:[%s7 + $0x10] sm:$0xff]
          %v2017 = vld [vmem:[%s7 + $0x18] sm:$0xff]
          %v2018 = vld [vmem:[%s8] sm:$0x1]
          %vm2019 = vcmask 261120
          %v2021 = vsel %vm2019, %v2013, 0
          %2023 = vmatprep.subr.mxu0 0.0
          %2024 = vmatpush1.msra.mxu0 %v2014
          %2025 = vmatprep.subr.mxu0 0.0
          %2026 = vmatpush1.msra.mxu0 %v2015
          %2027 = vmatprep.subr.mxu0 0.0
          %2028 = vmatpush1.msra.mxu0 %v2016
          %2029 = vmatprep.subr.mxu0 0.0
          %2030 = vmatpush1.msra.mxu0 %v2017
          %2031 = vmatprep.subr.mxu0 0.0
          %2032 = vmatpush1.msra.mxu0 0.0
          %2033 = vmatprep.subr.mxu0 0.0
          %2034 = vmatpush1.msra.mxu0 0.0
          %2035 = vmatprep.subr.mxu0 0.0
          %2036 = vmatpush1.msra.mxu0 0.0
          %2037 = vmatprep.subr.mxu0 0.0
          %2038 = vmatpush1.msra.mxu0 0.0
          %2039 = vmatprep.subr.mxu0 0.0
          %2040 = vmatpush1.msra.mxu0 0.0
          %2041 = vmatprep.subr.mxu0 0.0
          %2042 = vmatpush1.msra.mxu0 0.0
          %2043 = vmatprep.subr.mxu0 0.0
          %2044 = vmatpush1.msra.mxu0 0.0
          %2045 = vmatprep.subr.mxu0 0.0
          %2046 = vmatpush1.msra.mxu0 0.0
          %2047 = vmatprep.subr.mxu0 0.0
          %2048 = vmatpush1.msra.mxu0 0.0
          %2049 = vmatprep.subr.mxu0 0.0
          %2050 = vmatpush1.msra.mxu0 0.0
          %2051 = vmatprep.subr.mxu0 0.0
          %2052 = vmatpush1.msra.mxu0 0.0
          %2053 = vmatprep.subr.mxu0 0.0
          %2054 = vmatpush1.msra.mxu0 0.0
          %2055 = vmatprep.subr.mxu0 0.0
          %2056 = vmatpush1.msra.mxu0 0.0
          %2057 = vmatprep.subr.mxu0 0.0
          %2058 = vmatpush1.msra.mxu0 0.0
          %2059 = vmatprep.subr.mxu0 0.0
          %2060 = vmatpush1.msra.mxu0 0.0
          %2061 = vmatprep.subr.mxu0 0.0
          %2062 = vmatpush1.msra.mxu0 0.0
          %2063 = vmatprep.subr.mxu0 0.0
          %2064 = vmatpush1.msra.mxu0 0.0
          %2065 = vmatprep.subr.mxu0 0.0
          %2066 = vmatpush1.msra.mxu0 0.0
          %2067 = vmatprep.subr.mxu0 0.0
          %2068 = vmatpush1.msra.mxu0 0.0
          %2069 = vmatprep.subr.mxu0 0.0
          %2070 = vmatpush1.msra.mxu0 0.0
          %2071 = vmatprep.subr.mxu0 0.0
          %2072 = vmatpush1.msra.mxu0 0.0
          %2073 = vmatprep.subr.mxu0 0.0
          %2074 = vmatpush1.msra.mxu0 0.0
          %2075 = vmatprep.subr.mxu0 0.0
          %2076 = vmatpush1.msra.mxu0 0.0
          %2077 = vmatprep.subr.mxu0 0.0
          %2078 = vmatpush1.msra.mxu0 0.0
          %2079 = vmatprep.subr.mxu0 0.0
          %2080 = vmatpush1.msra.mxu0 0.0
          %2081 = vmatprep.subr.mxu0 0.0
          %2082 = vmatpush1.msra.mxu0 0.0
          %2083 = vmatprep.subr.mxu0 0.0
          %2084 = vmatpush1.msra.mxu0 0.0
          %2085 = vmatprep.subr.mxu0 0.0
          %2086 = vmatpush1.msra.mxu0 0.0
          %2087 = vmatprep.mubr.f32.mxu0 0.0
          %2088 = vmatmul.mubr.f32.gmra.mrb[0].mxu0 %v2021
          %v2089 = vpop.f32.mrb[0].mxu0
          %v2090 = vadd.f32 %v2018, %v2089
          %v2091 = vpop.f32.mrb[0].mxu0
          %2092 = vdwg.mxu0
          %v2093 = vmax.f32 %v2090, 0.0
          %v2094 = vld [vmem:[%s9] sm:$0xff]
          %v2095 = vld [vmem:[%s9 + $0x8] sm:$0xff]
          %v2096 = vld [vmem:[%s10] sm:$0x1]
          %v2098 = vsel %vm862, %v2093, 0
          %2100 = vmatprep.subr.mxu0 0.0
          %2101 = vmatpush1.msra.mxu0 %v2094
          %2102 = vmatprep.subr.mxu0 0.0
          %2103 = vmatpush1.msra.mxu0 %v2095
          %2104 = vmatprep.subr.mxu0 0.0
          %2105 = vmatpush1.msra.mxu0 0.0
          %2106 = vmatprep.subr.mxu0 0.0
          %2107 = vmatpush1.msra.mxu0 0.0
          %2108 = vmatprep.subr.mxu0 0.0
          %2109 = vmatpush1.msra.mxu0 0.0
          %2110 = vmatprep.subr.mxu0 0.0
          %2111 = vmatpush1.msra.mxu0 0.0
          %2112 = vmatprep.subr.mxu0 0.0
          %2113 = vmatpush1.msra.mxu0 0.0
          %2114 = vmatprep.subr.mxu0 0.0
          %2115 = vmatpush1.msra.mxu0 0.0
          %2116 = vmatprep.subr.mxu0 0.0
          %2117 = vmatpush1.msra.mxu0 0.0
          %2118 = vmatprep.subr.mxu0 0.0
          %2119 = vmatpush1.msra.mxu0 0.0
          %2120 = vmatprep.subr.mxu0 0.0
          %2121 = vmatpush1.msra.mxu0 0.0
          %2122 = vmatprep.subr.mxu0 0.0
          %2123 = vmatpush1.msra.mxu0 0.0
          %2124 = vmatprep.subr.mxu0 0.0
          %2125 = vmatpush1.msra.mxu0 0.0
          %2126 = vmatprep.subr.mxu0 0.0
          %2127 = vmatpush1.msra.mxu0 0.0
          %2128 = vmatprep.subr.mxu0 0.0
          %2129 = vmatpush1.msra.mxu0 0.0
          %2130 = vmatprep.subr.mxu0 0.0
          %2131 = vmatpush1.msra.mxu0 0.0
          %2132 = vmatprep.subr.mxu0 0.0
          %2133 = vmatpush1.msra.mxu0 0.0
          %2134 = vmatprep.subr.mxu0 0.0
          %2135 = vmatpush1.msra.mxu0 0.0
          %2136 = vmatprep.subr.mxu0 0.0
          %2137 = vmatpush1.msra.mxu0 0.0
          %2138 = vmatprep.subr.mxu0 0.0
          %2139 = vmatpush1.msra.mxu0 0.0
          %2140 = vmatprep.subr.mxu0 0.0
          %2141 = vmatpush1.msra.mxu0 0.0
          %2142 = vmatprep.subr.mxu0 0.0
          %2143 = vmatpush1.msra.mxu0 0.0
          %2144 = vmatprep.subr.mxu0 0.0
          %2145 = vmatpush1.msra.mxu0 0.0
          %2146 = vmatprep.subr.mxu0 0.0
          %2147 = vmatpush1.msra.mxu0 0.0
          %2148 = vmatprep.subr.mxu0 0.0
          %2149 = vmatpush1.msra.mxu0 0.0
          %2150 = vmatprep.subr.mxu0 0.0
          %2151 = vmatpush1.msra.mxu0 0.0
          %2152 = vmatprep.subr.mxu0 0.0
          %2153 = vmatpush1.msra.mxu0 0.0
          %2154 = vmatprep.subr.mxu0 0.0
          %2155 = vmatpush1.msra.mxu0 0.0
          %2156 = vmatprep.subr.mxu0 0.0
          %2157 = vmatpush1.msra.mxu0 0.0
          %2158 = vmatprep.subr.mxu0 0.0
          %2159 = vmatpush1.msra.mxu0 0.0
          %2160 = vmatprep.subr.mxu0 0.0
          %2161 = vmatpush1.msra.mxu0 0.0
          %2162 = vmatprep.subr.mxu0 0.0
          %2163 = vmatpush1.msra.mxu0 0.0
          %2164 = vmatprep.mubr.f32.mxu0 0.0
          %2165 = vmatmul.mubr.f32.gmra.mrb[0].mxu0 %v2098
          %v2166 = vpop.f32.mrb[0].mxu0
          %v2167 = vadd.f32 %v2096, %v2166
          %v2168 = vpop.f32.mrb[0].mxu0
          %2169 = vdwg.mxu0
          %vm2170 = vcmask 122880
          %2171 = vst.msk [vmem:[%s413] sm:$0x1] %vm2170, %v2167
        $region76: #{tpu_custom_call.1} parent=63 // pred_fallthru
          _
        %s2172 = sand.u32 %s283, 1
        %s2173 = scalar_lea.sflag [#allocation4], %s2172
        %s2174 = sand.u32 %s283, 1
        %s2175 = scalar_lea.vmem [#allocation3], %s2174
        // Predicated region
        $region77: #{tpu_custom_call.1} parent=63 // pred_check
          %p2176 = pneg %p293
        $region78: #{tpu_custom_call.1} parent=63 // pred_check_branch
          %2178 = sbr.rel (%p2176) target = $region80
        $region79: #{tpu_custom_call.1} parent=63 // pred_region
          %s2180 = ssub.s32 16, 16
          %2181 = vsyncadd %s2173, %s2180
          %s2182 = smul.addr %s29, 16
          %s2183 = scalar_lea.hbm %s11, %s2182
          %s2185 = sshll.u32 %s2175, 4
          %s2186 = int_to_ptr.vmem [resolvable:$true] %s2185
          %2188 = dma.vmem_to_hbm [thread:$0]  %s2186, 16, %s2183, %s2173
        $region80: #{tpu_custom_call.1} parent=63 // pred_fallthru
          _
      $region64: #{tpu_custom_call.1} parent=5 // pred_fallthru
        _
      %p2189 = scmp.le.s32.totalorder 2, %s20
      // Predicated region
      $region81: #{tpu_custom_call.1} parent=5 // pred_check
        %p2190 = pneg %p2189
      $region82: #{tpu_custom_call.1} parent=5 // pred_check_branch
        %2192 = sbr.rel (%p2190) target = $region84
      $region83: #{tpu_custom_call.1} parent=5 // pred_region
        %s2193 = ssub.s32 %s20, 2
        // Predicated region
        $region85: #{tpu_custom_call.1} parent=83 // pred_check
          %p2194 = pneg %p299
        $region86: #{tpu_custom_call.1} parent=83 // pred_check_branch
          %2196 = sbr.rel (%p2194) target = $region88
        $region87: #{tpu_custom_call.1} parent=83 // pred_region
          %s2197 = sand.u32 %s284, 1
          %s2198 = scalar_lea.sflag [#allocation4], %s2197
          %s2199 = sand.u32 %s284, 1
          %s2200 = scalar_lea.vmem [#allocation3], %s2199
          %2201 = dma.done %s2198, 16
        $region88: #{tpu_custom_call.1} parent=83 // pred_fallthru
          _
      $region84: #{tpu_custom_call.1} parent=5 // pred_fallthru
        _
    $region6: #{tpu_custom_call.1} parent=1 // loop_footer
      %s24 = sadd.s32 1, %s20
    $region7: #{tpu_custom_call.1} parent=1 // loop_footer_branch
      %19 = sbr.rel target = $region3
    $region8: #{tpu_custom_call.1} parent=1 // loop_exit
      _
    %2202 = vsyncpa [#allocation4], 1
    %s2203 = scalar_lea.sflag [#allocation4], 1
    %2204 = vsyncpa %s2203, 1

</llo_original>
